<compile_context>
chip_gen: v6e
topology: v6e:2x2x1
jax: 0.10.0
libtpu: 0.0.40
codegen_flags: <defaults>
</compile_context>

<pallas_src>
import math
import jax
import jax.numpy as jnp
from jax import lax
from jax.experimental import pallas as pl
from jax.experimental.pallas import tpu as pltpu

EPS = 1e-5


def _layer_norm(v, scale, shift, d):
    # torch reference: mean, unbiased var, (x-mean)/sqrt(var - eps),
    # then scale * norm * shift (multiplicative shift, as written in the module).
    mean = jnp.mean(v, axis=-1, keepdims=True)
    var = jnp.sum((v - mean) ** 2, axis=-1, keepdims=True) * (1.0 / (d - 1))
    norm = (v - mean) * lax.rsqrt(var - EPS)          # rsqrt -> EUP slot
    return scale * norm * shift


def _make_blocks_kernel(num_heads):
    def kernel(x_ref, wqkv_ref, wo_ref, bo_ref,
               w1_ref, b1_ref, w2_ref, b2_ref,
               ln1s_ref, ln1b_ref, ln2s_ref, ln2b_ref,
               o_ref, q_scr, k_scr, v_scr):
        l = pl.program_id(1)

        # Residual stream lives in the VMEM-resident output block across the
        # layer ("arbitrary") axis; load it from HBM only once, at layer 0.
        @pl.when(l == 0)
        def _():
            o_ref[0] = x_ref[0]

        x = o_ref[0]                                   # (T, D) float32
        T, D = x.shape
        hd = D // num_heads
        inv_sqrt_hd = 1.0 / math.sqrt(hd)

        # ---------------- attention branch ----------------
        h = _layer_norm(x, ln1s_ref[0], ln1b_ref[0], D)
        hb = h.astype(jnp.bfloat16)                    # bf16 operands, f32 accum
        # Fused QKV: one (T,D)x(D,3D) MXU matmul, sliced on 128-aligned lanes.
        qkv = jnp.dot(hb, wqkv_ref[0], preferred_element_type=jnp.float32)
        # scale folded into q (masked entries stay -inf either way).
        q = qkv[:, 0 * D:1 * D] * inv_sqrt_hd
        k = qkv[:, 1 * D:2 * D]
        v = qkv[:, 2 * D:3 * D]

        # Re-layout (T, D) -> (H, T, hd) through VMEM scratch so scores,
        # context and output projection each run as ONE head-batched
        # dot_general (no lane-axis concatenate).
        for hh in range(num_heads):                    # static, tiny H
            q_scr[hh] = q[:, hh * hd:(hh + 1) * hd]
            k_scr[hh] = k[:, hh * hd:(hh + 1) * hd]
            v_scr[hh] = v[:, hh * hd:(hh + 1) * hd]
        q3 = q_scr[...].astype(jnp.bfloat16)           # (H, T, hd)
        k3 = k_scr[...].astype(jnp.bfloat16)
        v3 = v_scr[...].astype(jnp.bfloat16)

        # Causal mask exactly as the reference: torch.triu(ones) masks the
        # diagonal too (row 0 fully masked -> NaN softmax, as in torch).
        row = lax.broadcasted_iota(jnp.int32, (T, T), 0)
        col = lax.broadcasted_iota(jnp.int32, (T, T), 1)
        mask = (col >= row)[None, :, :]

        s = jnp.einsum('htd,hsd->hts', q3, k3,
                       preferred_element_type=jnp.float32)      # (H, T, T)
        s = jnp.where(mask, -jnp.inf, s)
        m = jnp.max(s, axis=-1, keepdims=True)
        e = jnp.exp(s - m)
        p = e * pl.reciprocal(jnp.sum(e, axis=-1, keepdims=True), approx=True)

        ctx = jnp.einsum('hts,hsd->htd', p.astype(jnp.bfloat16), v3,
                         preferred_element_type=jnp.float32)    # (H, T, hd)
        proj = jnp.einsum('htd,hde->hte', ctx.astype(jnp.bfloat16), wo_ref[0],
                          preferred_element_type=jnp.float32)   # (H, T, D)
        attn = jnp.sum(proj, axis=0) + bo_ref[0]       # cheap cross-H vector add
        x = x + attn                                   # residual 1

        # ---------------- feed-forward branch ----------------
        h2 = _layer_norm(x, ln2s_ref[0], ln2b_ref[0], D)
        g = jnp.dot(h2.astype(jnp.bfloat16), w1_ref[0],
                    preferred_element_type=jnp.float32) + b1_ref[0]
        gelu = 0.5 * g * (1.0 + jnp.tanh(math.sqrt(2.0 / math.pi)
                                         * (g + 0.044715 * g * g * g)))
        ff = jnp.dot(gelu.astype(jnp.bfloat16), w2_ref[0],
                     preferred_element_type=jnp.float32) + b2_ref[0]
        o_ref[0] = x + ff                              # residual 2
    return kernel


def run_transformer_blocks(x, p, num_heads):
    """All n_layers transformer blocks in one fused pallas_call."""
    # TODO(synk): for production T/D (T=1024, D=768) add flash-style sequence
    # tiling + a 4*D hidden-dim reduction grid axis; at these toy shapes the
    # full-T blocks and per-layer bf16 weights fit comfortably in VMEM.
    B, T, D = x.shape
    L = p["wqkv"].shape[0]
    H4 = 4 * D
    hd = D // num_heads
    in_specs = [
        pl.BlockSpec((1, T, D), lambda b, l: (b, 0, 0)),                 # x (loaded once per b)
        pl.BlockSpec((1, D, 3 * D), lambda b, l: (l, 0, 0)),             # fused wqkv
        pl.BlockSpec((1, num_heads, hd, D), lambda b, l: (l, 0, 0, 0)),  # wo (head-split)
        pl.BlockSpec((1, 1, D), lambda b, l: (l, 0, 0)),                 # bo
        pl.BlockSpec((1, D, H4), lambda b, l: (l, 0, 0)),                # w1
        pl.BlockSpec((1, 1, H4), lambda b, l: (l, 0, 0)),                # b1
        pl.BlockSpec((1, H4, D), lambda b, l: (l, 0, 0)),                # w2
        pl.BlockSpec((1, 1, D), lambda b, l: (l, 0, 0)),                 # b2
        pl.BlockSpec((1, 1, D), lambda b, l: (l, 0, 0)),                 # ln1 scale
        pl.BlockSpec((1, 1, D), lambda b, l: (l, 0, 0)),                 # ln1 shift
        pl.BlockSpec((1, 1, D), lambda b, l: (l, 0, 0)),                 # ln2 scale
        pl.BlockSpec((1, 1, D), lambda b, l: (l, 0, 0)),                 # ln2 shift
    ]
    return pl.pallas_call(
        _make_blocks_kernel(num_heads),
        out_shape=jax.ShapeDtypeStruct((B, T, D), jnp.float32),
        grid_spec=pltpu.PrefetchScalarGridSpec(
            num_scalar_prefetch=0,
            grid=(B, L),                       # layer axis innermost (sequential)
            in_specs=in_specs,
            out_specs=pl.BlockSpec((1, T, D), lambda b, l: (b, 0, 0)),
            scratch_shapes=[pltpu.VMEM((num_heads, T, hd), jnp.float32)] * 3),
        compiler_params=pltpu.CompilerParams(
            dimension_semantics=("parallel", "arbitrary"),
            vmem_limit_bytes=48 * 1024 * 1024),
    )(x, p["wqkv"], p["wo_h"], p["bo"],
      p["w1"], p["b1"], p["w2"], p["b2"],
      p["ln1_s"], p["ln1_b"], p["ln2_s"], p["ln2_b"])


def _final_head_kernel(x_ref, lns_ref, lnb_ref, wout_ref, o_ref):
    x = x_ref[0]                                       # (T, D)
    D = x.shape[-1]
    h = _layer_norm(x, lns_ref[...], lnb_ref[...], D)
    o_ref[0] = jnp.dot(h.astype(jnp.bfloat16), wout_ref[...],
                       preferred_element_type=jnp.float32)


def run_final_head(x, ln_s, ln_b, wout_t):
    B, T, D = x.shape
    V = wout_t.shape[1]
    tv = V                                             # lane-dense vocab tile
    for cand in (512, 256, 128):
        if V % cand == 0:
            tv = cand
            break
    in_specs = [
        pl.BlockSpec((1, T, D), lambda b, j: (b, 0, 0)),
        pl.BlockSpec((1, D), lambda b, j: (0, 0)),
        pl.BlockSpec((1, D), lambda b, j: (0, 0)),
        pl.BlockSpec((D, tv), lambda b, j: (0, j)),
    ]
    return pl.pallas_call(
        _final_head_kernel,
        out_shape=jax.ShapeDtypeStruct((B, T, V), jnp.float32),
        grid_spec=pltpu.PrefetchScalarGridSpec(
            num_scalar_prefetch=0,
            grid=(B, V // tv),
            in_specs=in_specs,
            out_specs=pl.BlockSpec((1, T, tv), lambda b, j: (b, 0, j))),
        compiler_params=pltpu.CompilerParams(
            dimension_semantics=("parallel", "parallel"),
            vmem_limit_bytes=48 * 1024 * 1024),
    )(x, ln_s, ln_b, wout_t)


def init_params(key, cfg):
    D = cfg["emb_dim"]
    V = cfg["vocab_size"]
    Lctx = cfg["context_length"]
    H = cfg["n_heads"]
    hd = D // H
    H4 = 4 * D
    nl = cfg["n_layers"]
    bf = jnp.bfloat16

    def nrm(k, shape, std=0.02, dtype=jnp.float32):
        return (std * jax.random.normal(k, shape)).astype(dtype)

    keys = jax.random.split(key, 16)
    # NOTE: reference init is scale=ones, shift=zeros, which (because the
    # reference multiplies by shift) would zero every LayerNorm output; we use
    # deterministic near-one values to keep the compute non-degenerate.
    wq = nrm(keys[4], (nl, D, D), dtype=bf)
    wk = nrm(keys[5], (nl, D, D), dtype=bf)
    wv = nrm(keys[6], (nl, D, D), dtype=bf)
    params = {
        "tok_emb": nrm(keys[0], (V, D)),
        "pos_emb": nrm(keys[1], (Lctx, D)),
        "out_head": nrm(keys[2], (D, V), dtype=bf),          # [in, out], bf16 for MXU
        "final_ln_s": 1.0 + nrm(keys[3], (1, D)),
        "final_ln_b": jnp.ones((1, D), jnp.float32),
        "blocks": {
            # per-layer weights stacked with a leading n_layers axis, bf16.
            "wqkv": jnp.concatenate([wq, wk, wv], axis=-1),  # [L, D, 3D] fused QKV
            # out_proj weight pre-split by head: [L, H, hd, D]
            "wo_h": nrm(keys[7], (nl, D, D), dtype=bf).reshape(nl, H, hd, D),
            "bo": nrm(keys[8], (nl, 1, D)),
            "w1": nrm(keys[9], (nl, D, H4), dtype=bf),
            "b1": nrm(keys[10], (nl, 1, H4)),
            "w2": nrm(keys[11], (nl, H4, D), dtype=bf),
            "b2": nrm(keys[12], (nl, 1, D)),
            "ln1_s": 1.0 + nrm(keys[13], (nl, 1, D)),
            "ln1_b": jnp.ones((nl, 1, D), jnp.float32),
            "ln2_s": 1.0 + nrm(keys[14], (nl, 1, D)),
            "ln2_b": jnp.ones((nl, 1, D), jnp.float32),
        },
    }
    return params


def gpt2_forward(in_idx, params, cfg):
    B, T = in_idx.shape
    # Embedding gather + positional add: glue in plain JAX.
    tok = jnp.take(params["tok_emb"], in_idx, axis=0)         # (B, T, D)
    pos = params["pos_emb"][:T]                               # (T, D)
    x = (tok + pos[None, :, :]).astype(jnp.float32)
    # drop_emb / drop_shortcut / attention dropout: rate 0.0 -> identity.
    x = run_transformer_blocks(x, params["blocks"], cfg["n_heads"])
    logits = run_final_head(x, params["final_ln_s"], params["final_ln_b"],
                            params["out_head"])
    return logits


if __name__ == "__main__":
    cfg = {
        "vocab_size": 256,       # multiple of 128 -> lane-dense LM-head tiles
        "context_length": 16,
        "emb_dim": 128,          # multiple of 128 -> tile-aligned lane dim
        "n_heads": 4,            # head_dim = 32
        "n_layers": 2,
        "drop_rate": 0.0,
        "qkv_bias": False,
    }
    B, T = 2, 8

    root = jax.random.PRNGKey(0)
    k_params, k_idx = jax.random.split(root)
    params = init_params(k_params, cfg)
    in_idx = jax.random.randint(k_idx, (B, T), 0, cfg["vocab_size"], dtype=jnp.int32)

    logits = gpt2_forward(in_idx, params, cfg)
    jax.block_until_ready(logits)
    assert logits.shape == (B, T, cfg["vocab_size"])
    print("KERNEL_OK")
</pallas_src>

<mosaic_0001>
module attributes {stable_mosaic.version = 11 : i64} {
  func.func @kernel(%arg0: i32, %arg1: i32, %arg2: memref<1x8x128xf32, #tpu.memory_space<vmem>>, %arg3: memref<1x128x384xbf16, #tpu.memory_space<vmem>>, %arg4: memref<1x4x32x128xbf16, #tpu.memory_space<vmem>>, %arg5: memref<1x1x128xf32, #tpu.memory_space<vmem>>, %arg6: memref<1x128x512xbf16, #tpu.memory_space<vmem>>, %arg7: memref<1x1x512xf32, #tpu.memory_space<vmem>>, %arg8: memref<1x512x128xbf16, #tpu.memory_space<vmem>>, %arg9: memref<1x1x128xf32, #tpu.memory_space<vmem>>, %arg10: memref<1x1x128xf32, #tpu.memory_space<vmem>>, %arg11: memref<1x1x128xf32, #tpu.memory_space<vmem>>, %arg12: memref<1x1x128xf32, #tpu.memory_space<vmem>>, %arg13: memref<1x1x128xf32, #tpu.memory_space<vmem>>, %arg14: memref<1x8x128xf32, #tpu.memory_space<vmem>>, %arg15: memref<4x8x32xf32, #tpu.memory_space<vmem>>, %arg16: memref<4x8x32xf32, #tpu.memory_space<vmem>>, %arg17: memref<4x8x32xf32, #tpu.memory_space<vmem>>) attributes {dimension_semantics = [#tpu.dimension_semantics<parallel>, #tpu.dimension_semantics<arbitrary>], iteration_bounds = array<i64: 2, 2>, scalar_prefetch = 0 : i64, scratch_operands = 3 : i64, tpu.core_type = #tpu.core_type<tc>, window_params = [{transform_indices = @transform_0, window_bounds = array<i64: 1, 8, 128>}, {transform_indices = @transform_1, window_bounds = array<i64: 1, 128, 384>}, {transform_indices = @transform_2, window_bounds = array<i64: 1, 4, 32, 128>}, {transform_indices = @transform_3, window_bounds = array<i64: 1, 1, 128>}, {transform_indices = @transform_4, window_bounds = array<i64: 1, 128, 512>}, {transform_indices = @transform_5, window_bounds = array<i64: 1, 1, 512>}, {transform_indices = @transform_6, window_bounds = array<i64: 1, 512, 128>}, {transform_indices = @transform_7, window_bounds = array<i64: 1, 1, 128>}, {transform_indices = @transform_8, window_bounds = array<i64: 1, 1, 128>}, {transform_indices = @transform_9, window_bounds = array<i64: 1, 1, 128>}, {transform_indices = @transform_10, window_bounds = array<i64: 1, 1, 128>}, {transform_indices = @transform_11, window_bounds = array<i64: 1, 1, 128>}, {transform_indices = @transform_12, window_bounds = array<i64: 1, 8, 128>}]} {
    %c0_i32 = arith.constant 0 : i32
    %0 = arith.cmpi eq, %arg1, %c0_i32 : i32
    %1 = arith.extui %0 : i1 to i32
    %c0_i32_0 = arith.constant 0 : i32
    %2 = arith.cmpi ne, %1, %c0_i32_0 : i32
    scf.if %2 {
      %c0_106 = arith.constant 0 : index
      %c0_107 = arith.constant 0 : index
      %c0_108 = arith.constant 0 : index
      %184 = vector.load %arg2[%c0_106, %c0_107, %c0_108] : memref<1x8x128xf32, #tpu.memory_space<vmem>>, vector<1x8x128xf32>
      %185 = vector.shape_cast %184 : vector<1x8x128xf32> to vector<8x128xf32>
      %c0_109 = arith.constant 0 : index
      %c0_110 = arith.constant 0 : index
      %c0_111 = arith.constant 0 : index
      %186 = vector.load %arg14[%c0_109, %c0_110, %c0_111] : memref<1x8x128xf32, #tpu.memory_space<vmem>>, vector<1x8x128xf32>
      %187 = vector.shape_cast %186 : vector<1x8x128xf32> to vector<8x128xf32>
      %188 = vector.shape_cast %185 : vector<8x128xf32> to vector<1x8x128xf32>
      tpu.vector_store %arg14[%c0_109, %c0_110, %c0_111], %188 {strides = array<i32>} : memref<1x8x128xf32, #tpu.memory_space<vmem>>, vector<1x8x128xf32>,
    } else {
    }
    %c0 = arith.constant 0 : index
    %c0_1 = arith.constant 0 : index
    %c0_2 = arith.constant 0 : index
    %3 = vector.load %arg14[%c0, %c0_1, %c0_2] : memref<1x8x128xf32, #tpu.memory_space<vmem>>, vector<1x8x128xf32>
    %4 = vector.shape_cast %3 : vector<1x8x128xf32> to vector<8x128xf32>
    %c0_3 = arith.constant 0 : index
    %c0_4 = arith.constant 0 : index
    %c0_5 = arith.constant 0 : index
    %5 = vector.load %arg10[%c0_3, %c0_4, %c0_5] : memref<1x1x128xf32, #tpu.memory_space<vmem>>, vector<1x1x128xf32>
    %6 = vector.shape_cast %5 : vector<1x1x128xf32> to vector<1x128xf32>
    %c0_6 = arith.constant 0 : index
    %c0_7 = arith.constant 0 : index
    %c0_8 = arith.constant 0 : index
    %7 = vector.load %arg11[%c0_6, %c0_7, %c0_8] : memref<1x1x128xf32, #tpu.memory_space<vmem>>, vector<1x1x128xf32>
    %8 = vector.shape_cast %7 : vector<1x1x128xf32> to vector<1x128xf32>
    %cst = arith.constant dense<0.000000e+00> : vector<8xf32>
    %9 = vector.multi_reduction <add>, %4, %cst [1] : vector<8x128xf32> to vector<8xf32>
    %10 = vector.shape_cast %9 : vector<8xf32> to vector<8x1xf32>
    %cst_9 = arith.constant 1.280000e+02 : f32
    %11 = vector.broadcast %cst_9 : f32 to vector<8x1xf32>
    %12 = arith.divf %10, %11 : vector<8x1xf32>
    %13 = vector.broadcast %12 : vector<8x1xf32> to vector<8x128xf32>
    %14 = arith.subf %4, %13 : vector<8x128xf32>
    %15 = arith.mulf %14, %14 : vector<8x128xf32>
    %cst_10 = arith.constant dense<0.000000e+00> : vector<8xf32>
    %16 = vector.multi_reduction <add>, %15, %cst_10 [1] : vector<8x128xf32> to vector<8xf32>
    %17 = vector.shape_cast %16 : vector<8xf32> to vector<8x1xf32>
    %cst_11 = arith.constant 0.00787401571 : f32
    %18 = vector.broadcast %cst_11 : f32 to vector<8x1xf32>
    %19 = arith.mulf %17, %18 : vector<8x1xf32>
    %20 = vector.broadcast %12 : vector<8x1xf32> to vector<8x128xf32>
    %21 = arith.subf %4, %20 : vector<8x128xf32>
    %cst_12 = arith.constant 9.99999974E-6 : f32
    %22 = vector.broadcast %cst_12 : f32 to vector<8x1xf32>
    %23 = arith.subf %19, %22 : vector<8x1xf32>
    %24 = math.rsqrt %23 : vector<8x1xf32>
    %25 = vector.broadcast %24 : vector<8x1xf32> to vector<8x128xf32>
    %26 = arith.mulf %21, %25 : vector<8x128xf32>
    %27 = vector.broadcast %6 : vector<1x128xf32> to vector<8x128xf32>
    %28 = arith.mulf %27, %26 : vector<8x128xf32>
    %29 = vector.broadcast %8 : vector<1x128xf32> to vector<8x128xf32>
    %30 = arith.mulf %28, %29 : vector<8x128xf32>
    %31 = arith.truncf %30 : vector<8x128xf32> to vector<8x128xbf16>
    %c0_13 = arith.constant 0 : index
    %c0_14 = arith.constant 0 : index
    %c0_15 = arith.constant 0 : index
    %32 = vector.load %arg3[%c0_13, %c0_14, %c0_15] : memref<1x128x384xbf16, #tpu.memory_space<vmem>>, vector<1x128x384xbf16>
    %33 = vector.shape_cast %32 : vector<1x128x384xbf16> to vector<128x384xbf16>
    %cst_16 = arith.constant dense<0.000000e+00> : vector<8x384xf32>
    %34 = tpu.matmul %31, %33, %cst_16 {dimension_numbers = #tpu.dot_dimension_numbers<[1], [0], [0], [1], [0, 0, 1, 1], [], []>} : vector<8x128xbf16>, vector<128x384xbf16>, vector<8x384xf32> -> vector<8x384xf32>
    %35 = vector.extract_strided_slice %34 {offsets = [0, 0], sizes = [8, 128], strides = [1, 1]} : vector<8x384xf32> to vector<8x128xf32>
    %cst_17 = arith.constant 0.176776692 : f32
    %36 = vector.broadcast %cst_17 : f32 to vector<8x128xf32>
    %37 = arith.mulf %35, %36 : vector<8x128xf32>
    %38 = vector.extract_strided_slice %34 {offsets = [0, 128], sizes = [8, 128], strides = [1, 1]} : vector<8x384xf32> to vector<8x128xf32>
    %39 = vector.extract_strided_slice %34 {offsets = [0, 256], sizes = [8, 128], strides = [1, 1]} : vector<8x384xf32> to vector<8x128xf32>
    %40 = vector.extract_strided_slice %37 {offsets = [0, 0], sizes = [8, 32], strides = [1, 1]} : vector<8x128xf32> to vector<8x32xf32>
    %c0_18 = arith.constant 0 : index
    %c0_19 = arith.constant 0 : index
    %c0_20 = arith.constant 0 : index
    %41 = vector.load %arg15[%c0_18, %c0_19, %c0_20] : memref<4x8x32xf32, #tpu.memory_space<vmem>>, vector<1x8x32xf32>
    %42 = vector.shape_cast %41 : vector<1x8x32xf32> to vector<8x32xf32>
    %43 = vector.shape_cast %40 : vector<8x32xf32> to vector<1x8x32xf32>
    tpu.vector_store %arg15[%c0_18, %c0_19, %c0_20], %43 {strides = array<i32>} : memref<4x8x32xf32, #tpu.memory_space<vmem>>, vector<1x8x32xf32>,
    %44 = vector.extract_strided_slice %38 {offsets = [0, 0], sizes = [8, 32], strides = [1, 1]} : vector<8x128xf32> to vector<8x32xf32>
    %c0_21 = arith.constant 0 : index
    %c0_22 = arith.constant 0 : index
    %c0_23 = arith.constant 0 : index
    %45 = vector.load %arg16[%c0_21, %c0_22, %c0_23] : memref<4x8x32xf32, #tpu.memory_space<vmem>>, vector<1x8x32xf32>
    %46 = vector.shape_cast %45 : vector<1x8x32xf32> to vector<8x32xf32>
    %47 = vector.shape_cast %44 : vector<8x32xf32> to vector<1x8x32xf32>
    tpu.vector_store %arg16[%c0_21, %c0_22, %c0_23], %47 {strides = array<i32>} : memref<4x8x32xf32, #tpu.memory_space<vmem>>, vector<1x8x32xf32>,
    %48 = vector.extract_strided_slice %39 {offsets = [0, 0], sizes = [8, 32], strides = [1, 1]} : vector<8x128xf32> to vector<8x32xf32>
    %c0_24 = arith.constant 0 : index
    %c0_25 = arith.constant 0 : index
    %c0_26 = arith.constant 0 : index
    %49 = vector.load %arg17[%c0_24, %c0_25, %c0_26] : memref<4x8x32xf32, #tpu.memory_space<vmem>>, vector<1x8x32xf32>
    %50 = vector.shape_cast %49 : vector<1x8x32xf32> to vector<8x32xf32>
    %51 = vector.shape_cast %48 : vector<8x32xf32> to vector<1x8x32xf32>
    tpu.vector_store %arg17[%c0_24, %c0_25, %c0_26], %51 {strides = array<i32>} : memref<4x8x32xf32, #tpu.memory_space<vmem>>, vector<1x8x32xf32>,
    %52 = vector.extract_strided_slice %37 {offsets = [0, 32], sizes = [8, 32], strides = [1, 1]} : vector<8x128xf32> to vector<8x32xf32>
    %c1 = arith.constant 1 : index
    %c0_27 = arith.constant 0 : index
    %c0_28 = arith.constant 0 : index
    %53 = vector.load %arg15[%c1, %c0_27, %c0_28] : memref<4x8x32xf32, #tpu.memory_space<vmem>>, vector<1x8x32xf32>
    %54 = vector.shape_cast %53 : vector<1x8x32xf32> to vector<8x32xf32>
    %55 = vector.shape_cast %52 : vector<8x32xf32> to vector<1x8x32xf32>
    tpu.vector_store %arg15[%c1, %c0_27, %c0_28], %55 {strides = array<i32>} : memref<4x8x32xf32, #tpu.memory_space<vmem>>, vector<1x8x32xf32>,
    %56 = vector.extract_strided_slice %38 {offsets = [0, 32], sizes = [8, 32], strides = [1, 1]} : vector<8x128xf32> to vector<8x32xf32>
    %c1_29 = arith.constant 1 : index
    %c0_30 = arith.constant 0 : index
    %c0_31 = arith.constant 0 : index
    %57 = vector.load %arg16[%c1_29, %c0_30, %c0_31] : memref<4x8x32xf32, #tpu.memory_space<vmem>>, vector<1x8x32xf32>
    %58 = vector.shape_cast %57 : vector<1x8x32xf32> to vector<8x32xf32>
    %59 = vector.shape_cast %56 : vector<8x32xf32> to vector<1x8x32xf32>
    tpu.vector_store %arg16[%c1_29, %c0_30, %c0_31], %59 {strides = array<i32>} : memref<4x8x32xf32, #tpu.memory_space<vmem>>, vector<1x8x32xf32>,
    %60 = vector.extract_strided_slice %39 {offsets = [0, 32], sizes = [8, 32], strides = [1, 1]} : vector<8x128xf32> to vector<8x32xf32>
    %c1_32 = arith.constant 1 : index
    %c0_33 = arith.constant 0 : index
    %c0_34 = arith.constant 0 : index
    %61 = vector.load %arg17[%c1_32, %c0_33, %c0_34] : memref<4x8x32xf32, #tpu.memory_space<vmem>>, vector<1x8x32xf32>
    %62 = vector.shape_cast %61 : vector<1x8x32xf32> to vector<8x32xf32>
    %63 = vector.shape_cast %60 : vector<8x32xf32> to vector<1x8x32xf32>
    tpu.vector_store %arg17[%c1_32, %c0_33, %c0_34], %63 {strides = array<i32>} : memref<4x8x32xf32, #tpu.memory_space<vmem>>, vector<1x8x32xf32>,
    %64 = vector.extract_strided_slice %37 {offsets = [0, 64], sizes = [8, 32], strides = [1, 1]} : vector<8x128xf32> to vector<8x32xf32>
    %c2 = arith.constant 2 : index
    %c0_35 = arith.constant 0 : index
    %c0_36 = arith.constant 0 : index
    %65 = vector.load %arg15[%c2, %c0_35, %c0_36] : memref<4x8x32xf32, #tpu.memory_space<vmem>>, vector<1x8x32xf32>
    %66 = vector.shape_cast %65 : vector<1x8x32xf32> to vector<8x32xf32>
    %67 = vector.shape_cast %64 : vector<8x32xf32> to vector<1x8x32xf32>
    tpu.vector_store %arg15[%c2, %c0_35, %c0_36], %67 {strides = array<i32>} : memref<4x8x32xf32, #tpu.memory_space<vmem>>, vector<1x8x32xf32>,
    %68 = vector.extract_strided_slice %38 {offsets = [0, 64], sizes = [8, 32], strides = [1, 1]} : vector<8x128xf32> to vector<8x32xf32>
    %c2_37 = arith.constant 2 : index
    %c0_38 = arith.constant 0 : index
    %c0_39 = arith.constant 0 : index
    %69 = vector.load %arg16[%c2_37, %c0_38, %c0_39] : memref<4x8x32xf32, #tpu.memory_space<vmem>>, vector<1x8x32xf32>
    %70 = vector.shape_cast %69 : vector<1x8x32xf32> to vector<8x32xf32>
    %71 = vector.shape_cast %68 : vector<8x32xf32> to vector<1x8x32xf32>
    tpu.vector_store %arg16[%c2_37, %c0_38, %c0_39], %71 {strides = array<i32>} : memref<4x8x32xf32, #tpu.memory_space<vmem>>, vector<1x8x32xf32>,
    %72 = vector.extract_strided_slice %39 {offsets = [0, 64], sizes = [8, 32], strides = [1, 1]} : vector<8x128xf32> to vector<8x32xf32>
    %c2_40 = arith.constant 2 : index
    %c0_41 = arith.constant 0 : index
    %c0_42 = arith.constant 0 : index
    %73 = vector.load %arg17[%c2_40, %c0_41, %c0_42] : memref<4x8x32xf32, #tpu.memory_space<vmem>>, vector<1x8x32xf32>
    %74 = vector.shape_cast %73 : vector<1x8x32xf32> to vector<8x32xf32>
    %75 = vector.shape_cast %72 : vector<8x32xf32> to vector<1x8x32xf32>
    tpu.vector_store %arg17[%c2_40, %c0_41, %c0_42], %75 {strides = array<i32>} : memref<4x8x32xf32, #tpu.memory_space<vmem>>, vector<1x8x32xf32>,
    %76 = vector.extract_strided_slice %37 {offsets = [0, 96], sizes = [8, 32], strides = [1, 1]} : vector<8x128xf32> to vector<8x32xf32>
    %c3 = arith.constant 3 : index
    %c0_43 = arith.constant 0 : index
    %c0_44 = arith.constant 0 : index
    %77 = vector.load %arg15[%c3, %c0_43, %c0_44] : memref<4x8x32xf32, #tpu.memory_space<vmem>>, vector<1x8x32xf32>
    %78 = vector.shape_cast %77 : vector<1x8x32xf32> to vector<8x32xf32>
    %79 = vector.shape_cast %76 : vector<8x32xf32> to vector<1x8x32xf32>
    tpu.vector_store %arg15[%c3, %c0_43, %c0_44], %79 {strides = array<i32>} : memref<4x8x32xf32, #tpu.memory_space<vmem>>, vector<1x8x32xf32>,
    %80 = vector.extract_strided_slice %38 {offsets = [0, 96], sizes = [8, 32], strides = [1, 1]} : vector<8x128xf32> to vector<8x32xf32>
    %c3_45 = arith.constant 3 : index
    %c0_46 = arith.constant 0 : index
    %c0_47 = arith.constant 0 : index
    %81 = vector.load %arg16[%c3_45, %c0_46, %c0_47] : memref<4x8x32xf32, #tpu.memory_space<vmem>>, vector<1x8x32xf32>
    %82 = vector.shape_cast %81 : vector<1x8x32xf32> to vector<8x32xf32>
    %83 = vector.shape_cast %80 : vector<8x32xf32> to vector<1x8x32xf32>
    tpu.vector_store %arg16[%c3_45, %c0_46, %c0_47], %83 {strides = array<i32>} : memref<4x8x32xf32, #tpu.memory_space<vmem>>, vector<1x8x32xf32>,
    %84 = vector.extract_strided_slice %39 {offsets = [0, 96], sizes = [8, 32], strides = [1, 1]} : vector<8x128xf32> to vector<8x32xf32>
    %c3_48 = arith.constant 3 : index
    %c0_49 = arith.constant 0 : index
    %c0_50 = arith.constant 0 : index
    %85 = vector.load %arg17[%c3_48, %c0_49, %c0_50] : memref<4x8x32xf32, #tpu.memory_space<vmem>>, vector<1x8x32xf32>
    %86 = vector.shape_cast %85 : vector<1x8x32xf32> to vector<8x32xf32>
    %87 = vector.shape_cast %84 : vector<8x32xf32> to vector<1x8x32xf32>
    tpu.vector_store %arg17[%c3_48, %c0_49, %c0_50], %87 {strides = array<i32>} : memref<4x8x32xf32, #tpu.memory_space<vmem>>, vector<1x8x32xf32>,
    %c0_51 = arith.constant 0 : index
    %c0_52 = arith.constant 0 : index
    %c0_53 = arith.constant 0 : index
    %88 = vector.load %arg15[%c0_51, %c0_52, %c0_53] : memref<4x8x32xf32, #tpu.memory_space<vmem>>, vector<4x8x32xf32>
    %89 = arith.truncf %88 : vector<4x8x32xf32> to vector<4x8x32xbf16>
    %c0_54 = arith.constant 0 : index
    %c0_55 = arith.constant 0 : index
    %c0_56 = arith.constant 0 : index
    %90 = vector.load %arg16[%c0_54, %c0_55, %c0_56] : memref<4x8x32xf32, #tpu.memory_space<vmem>>, vector<4x8x32xf32>
    %91 = arith.truncf %90 : vector<4x8x32xf32> to vector<4x8x32xbf16>
    %c0_57 = arith.constant 0 : index
    %c0_58 = arith.constant 0 : index
    %c0_59 = arith.constant 0 : index
    %92 = vector.load %arg17[%c0_57, %c0_58, %c0_59] : memref<4x8x32xf32, #tpu.memory_space<vmem>>, vector<4x8x32xf32>
    %93 = arith.truncf %92 : vector<4x8x32xf32> to vector<4x8x32xbf16>
    %94 = tpu.iota {dimensions = array<i32: 0>} : vector<8x8xi32>
    %95 = tpu.iota {dimensions = array<i32: 1>} : vector<8x8xi32>
    %96 = arith.cmpi sge, %95, %94 : vector<8x8xi32>
    %97 = vector.shape_cast %96 : vector<8x8xi1> to vector<1x8x8xi1>
    "tpu.trace_start"() <{level = 10 : i32, message = "htd,hsd->hts"}> : () -> ()
    %cst_60 = arith.constant dense<0.000000e+00> : vector<4x8x8xf32>
    %98 = tpu.matmul %89, %91, %cst_60 {dimension_numbers = #tpu.dot_dimension_numbers<[2], [2], [1], [1], [0, 0, 0, 1, 1, 1], [0], [0]>} : vector<4x8x32xbf16>, vector<4x8x32xbf16>, vector<4x8x8xf32> -> vector<4x8x8xf32>
    %cst_61 = arith.constant 0xFF800000 : f32
    "tpu.trace_stop"() : () -> ()
    %99 = vector.shape_cast %97 : vector<1x8x8xi1> to vector<1x8x8xi1>
    %100 = vector.broadcast %99 : vector<1x8x8xi1> to vector<4x8x8xi1>
    %101 = vector.broadcast %cst_61 : f32 to vector<4x8x8xf32>
    %102 = arith.select %100, %101, %98 : vector<4x8x8xi1>, vector<4x8x8xf32>
    %cst_62 = arith.constant dense<0xFF800000> : vector<4x8xf32>
    %103 = vector.multi_reduction <maximumf>, %102, %cst_62 [2] : vector<4x8x8xf32> to vector<4x8xf32>
    %104 = vector.shape_cast %103 : vector<4x8xf32> to vector<4x8x1xf32>
    %105 = vector.broadcast %104 : vector<4x8x1xf32> to vector<4x8x8xf32>
    %106 = arith.subf %102, %105 : vector<4x8x8xf32>
    %107 = math.exp %106 : vector<4x8x8xf32>
    %cst_63 = arith.constant dense<0.000000e+00> : vector<4x8xf32>
    %108 = vector.multi_reduction <add>, %107, %cst_63 [2] : vector<4x8x8xf32> to vector<4x8xf32>
    %109 = vector.shape_cast %108 : vector<4x8xf32> to vector<4x8x1xf32>
    %110 = tpu.reciprocal %109 {approx = true} : vector<4x8x1xf32> -> vector<4x8x1xf32>
    %111 = vector.broadcast %110 : vector<4x8x1xf32> to vector<4x8x8xf32>
    %112 = arith.mulf %107, %111 : vector<4x8x8xf32>
    %113 = arith.truncf %112 : vector<4x8x8xf32> to vector<4x8x8xbf16>
    "tpu.trace_start"() <{level = 10 : i32, message = "hts,hsd->htd"}> : () -> ()
    %cst_64 = arith.constant dense<0.000000e+00> : vector<4x8x32xf32>
    %114 = tpu.matmul %113, %93, %cst_64 {dimension_numbers = #tpu.dot_dimension_numbers<[2], [1], [1], [2], [0, 0, 0, 1, 1, 2], [0], [0]>} : vector<4x8x8xbf16>, vector<4x8x32xbf16>, vector<4x8x32xf32> -> vector<4x8x32xf32>
    "tpu.trace_stop"() : () -> ()
    %115 = arith.truncf %114 : vector<4x8x32xf32> to vector<4x8x32xbf16>
    %c0_65 = arith.constant 0 : index
    %c0_66 = arith.constant 0 : index
    %c0_67 = arith.constant 0 : index
    %c0_68 = arith.constant 0 : index
    %116 = vector.load %arg4[%c0_65, %c0_66, %c0_67, %c0_68] : memref<1x4x32x128xbf16, #tpu.memory_space<vmem>>, vector<1x4x32x128xbf16>
    %117 = vector.shape_cast %116 : vector<1x4x32x128xbf16> to vector<4x32x128xbf16>
    "tpu.trace_start"() <{level = 10 : i32, message = "htd,hde->hte"}> : () -> ()
    %cst_69 = arith.constant dense<0.000000e+00> : vector<4x8x128xf32>
    %118 = tpu.matmul %115, %117, %cst_69 {dimension_numbers = #tpu.dot_dimension_numbers<[2], [1], [1], [2], [0, 0, 0, 1, 1, 2], [0], [0]>} : vector<4x8x32xbf16>, vector<4x32x128xbf16>, vector<4x8x128xf32> -> vector<4x8x128xf32>
    "tpu.trace_stop"() : () -> ()
    %cst_70 = arith.constant dense<0.000000e+00> : vector<8x128xf32>
    %119 = vector.multi_reduction <add>, %118, %cst_70 [0] : vector<4x8x128xf32> to vector<8x128xf32>
    %c0_71 = arith.constant 0 : index
    %c0_72 = arith.constant 0 : index
    %c0_73 = arith.constant 0 : index
    %120 = vector.load %arg5[%c0_71, %c0_72, %c0_73] : memref<1x1x128xf32, #tpu.memory_space<vmem>>, vector<1x1x128xf32>
    %121 = vector.shape_cast %120 : vector<1x1x128xf32> to vector<1x128xf32>
    %122 = vector.broadcast %121 : vector<1x128xf32> to vector<8x128xf32>
    %123 = arith.addf %119, %122 : vector<8x128xf32>
    %124 = arith.addf %4, %123 : vector<8x128xf32>
    %c0_74 = arith.constant 0 : index
    %c0_75 = arith.constant 0 : index
    %c0_76 = arith.constant 0 : index
    %125 = vector.load %arg12[%c0_74, %c0_75, %c0_76] : memref<1x1x128xf32, #tpu.memory_space<vmem>>, vector<1x1x128xf32>
    %126 = vector.shape_cast %125 : vector<1x1x128xf32> to vector<1x128xf32>
    %c0_77 = arith.constant 0 : index
    %c0_78 = arith.constant 0 : index
    %c0_79 = arith.constant 0 : index
    %127 = vector.load %arg13[%c0_77, %c0_78, %c0_79] : memref<1x1x128xf32, #tpu.memory_space<vmem>>, vector<1x1x128xf32>
    %128 = vector.shape_cast %127 : vector<1x1x128xf32> to vector<1x128xf32>
    %cst_80 = arith.constant dense<0.000000e+00> : vector<8xf32>
    %129 = vector.multi_reduction <add>, %124, %cst_80 [1] : vector<8x128xf32> to vector<8xf32>
    %130 = vector.shape_cast %129 : vector<8xf32> to vector<8x1xf32>
    %cst_81 = arith.constant 1.280000e+02 : f32
    %131 = vector.broadcast %cst_81 : f32 to vector<8x1xf32>
    %132 = arith.divf %130, %131 : vector<8x1xf32>
    %133 = vector.broadcast %132 : vector<8x1xf32> to vector<8x128xf32>
    %134 = arith.subf %124, %133 : vector<8x128xf32>
    %135 = arith.mulf %134, %134 : vector<8x128xf32>
    %cst_82 = arith.constant dense<0.000000e+00> : vector<8xf32>
    %136 = vector.multi_reduction <add>, %135, %cst_82 [1] : vector<8x128xf32> to vector<8xf32>
    %137 = vector.shape_cast %136 : vector<8xf32> to vector<8x1xf32>
    %cst_83 = arith.constant 0.00787401571 : f32
    %138 = vector.broadcast %cst_83 : f32 to vector<8x1xf32>
    %139 = arith.mulf %137, %138 : vector<8x1xf32>
    %140 = vector.broadcast %132 : vector<8x1xf32> to vector<8x128xf32>
    %141 = arith.subf %124, %140 : vector<8x128xf32>
    %cst_84 = arith.constant 9.99999974E-6 : f32
    %142 = vector.broadcast %cst_84 : f32 to vector<8x1xf32>
    %143 = arith.subf %139, %142 : vector<8x1xf32>
    %144 = math.rsqrt %143 : vector<8x1xf32>
    %145 = vector.broadcast %144 : vector<8x1xf32> to vector<8x128xf32>
    %146 = arith.mulf %141, %145 : vector<8x128xf32>
    %147 = vector.broadcast %126 : vector<1x128xf32> to vector<8x128xf32>
    %148 = arith.mulf %147, %146 : vector<8x128xf32>
    %149 = vector.broadcast %128 : vector<1x128xf32> to vector<8x128xf32>
    %150 = arith.mulf %148, %149 : vector<8x128xf32>
    %151 = arith.truncf %150 : vector<8x128xf32> to vector<8x128xbf16>
    %c0_85 = arith.constant 0 : index
    %c0_86 = arith.constant 0 : index
    %c0_87 = arith.constant 0 : index
    %152 = vector.load %arg6[%c0_85, %c0_86, %c0_87] : memref<1x128x512xbf16, #tpu.memory_space<vmem>>, vector<1x128x512xbf16>
    %153 = vector.shape_cast %152 : vector<1x128x512xbf16> to vector<128x512xbf16>
    %cst_88 = arith.constant dense<0.000000e+00> : vector<8x512xf32>
    %154 = tpu.matmul %151, %153, %cst_88 {dimension_numbers = #tpu.dot_dimension_numbers<[1], [0], [0], [1], [0, 0, 1, 1], [], []>} : vector<8x128xbf16>, vector<128x512xbf16>, vector<8x512xf32> -> vector<8x512xf32>
    %c0_89 = arith.constant 0 : index
    %c0_90 = arith.constant 0 : index
    %c0_91 = arith.constant 0 : index
    %155 = vector.load %arg7[%c0_89, %c0_90, %c0_91] : memref<1x1x512xf32, #tpu.memory_space<vmem>>, vector<1x1x512xf32>
    %156 = vector.shape_cast %155 : vector<1x1x512xf32> to vector<1x512xf32>
    %157 = vector.broadcast %156 : vector<1x512xf32> to vector<8x512xf32>
    %158 = arith.addf %154, %157 : vector<8x512xf32>
    %cst_92 = arith.constant 5.000000e-01 : f32
    %159 = vector.broadcast %cst_92 : f32 to vector<8x512xf32>
    %160 = arith.mulf %159, %158 : vector<8x512xf32>
    %cst_93 = arith.constant 4.471500e-02 : f32
    %161 = vector.broadcast %cst_93 : f32 to vector<8x512xf32>
    %162 = arith.mulf %161, %158 : vector<8x512xf32>
    %163 = arith.mulf %162, %158 : vector<8x512xf32>
    %164 = arith.mulf %163, %158 : vector<8x512xf32>
    %165 = arith.addf %158, %164 : vector<8x512xf32>
    %cst_94 = arith.constant 0.797884583 : f32
    %166 = vector.broadcast %cst_94 : f32 to vector<8x512xf32>
    %167 = arith.mulf %166, %165 : vector<8x512xf32>
    %168 = math.tanh %167 : vector<8x512xf32>
    %cst_95 = arith.constant 1.000000e+00 : f32
    %169 = vector.broadcast %cst_95 : f32 to vector<8x512xf32>
    %170 = arith.addf %169, %168 : vector<8x512xf32>
    %171 = arith.mulf %160, %170 : vector<8x512xf32>
    %172 = arith.truncf %171 : vector<8x512xf32> to vector<8x512xbf16>
    %c0_96 = arith.constant 0 : index
    %c0_97 = arith.constant 0 : index
    %c0_98 = arith.constant 0 : index
    %173 = vector.load %arg8[%c0_96, %c0_97, %c0_98] : memref<1x512x128xbf16, #tpu.memory_space<vmem>>, vector<1x512x128xbf16>
    %174 = vector.shape_cast %173 : vector<1x512x128xbf16> to vector<512x128xbf16>
    %cst_99 = arith.constant dense<0.000000e+00> : vector<8x128xf32>
    %175 = tpu.matmul %172, %174, %cst_99 {dimension_numbers = #tpu.dot_dimension_numbers<[1], [0], [0], [1], [0, 0, 1, 1], [], []>} : vector<8x512xbf16>, vector<512x128xbf16>, vector<8x128xf32> -> vector<8x128xf32>
    %c0_100 = arith.constant 0 : index
    %c0_101 = arith.constant 0 : index
    %c0_102 = arith.constant 0 : index
    %176 = vector.load %arg9[%c0_100, %c0_101, %c0_102] : memref<1x1x128xf32, #tpu.memory_space<vmem>>, vector<1x1x128xf32>
    %177 = vector.shape_cast %176 : vector<1x1x128xf32> to vector<1x128xf32>
    %178 = vector.broadcast %177 : vector<1x128xf32> to vector<8x128xf32>
    %179 = arith.addf %175, %178 : vector<8x128xf32>
    %180 = arith.addf %124, %179 : vector<8x128xf32>
    %c0_103 = arith.constant 0 : index
    %c0_104 = arith.constant 0 : index
    %c0_105 = arith.constant 0 : index
    %181 = vector.load %arg14[%c0_103, %c0_104, %c0_105] : memref<1x8x128xf32, #tpu.memory_space<vmem>>, vector<1x8x128xf32>
    %182 = vector.shape_cast %181 : vector<1x8x128xf32> to vector<8x128xf32>
    %183 = vector.shape_cast %180 : vector<8x128xf32> to vector<1x8x128xf32>
    tpu.vector_store %arg14[%c0_103, %c0_104, %c0_105], %183 {strides = array<i32>} : memref<1x8x128xf32, #tpu.memory_space<vmem>>, vector<1x8x128xf32>,
    return
  }
  func.func @transform_0(%arg0: i32, %arg1: i32) -> (i32, i32, i32) {
    %c0_i32 = arith.constant 0 : i32
    %c0_i32_0 = arith.constant 0 : i32
    %c0_i32_1 = arith.constant 0 : i32
    return %arg0, %c0_i32, %c0_i32_0 : i32, i32, i32
  }
  func.func @transform_1(%arg0: i32, %arg1: i32) -> (i32, i32, i32) {
    %c0_i32 = arith.constant 0 : i32
    %c0_i32_0 = arith.constant 0 : i32
    %c0_i32_1 = arith.constant 0 : i32
    return %arg1, %c0_i32, %c0_i32_0 : i32, i32, i32
  }
  func.func @transform_2(%arg0: i32, %arg1: i32) -> (i32, i32, i32, i32) {
    %c0_i32 = arith.constant 0 : i32
    %c0_i32_0 = arith.constant 0 : i32
    %c0_i32_1 = arith.constant 0 : i32
    %c0_i32_2 = arith.constant 0 : i32
    return %arg1, %c0_i32, %c0_i32_0, %c0_i32_1 : i32, i32, i32, i32
  }
  func.func @transform_3(%arg0: i32, %arg1: i32) -> (i32, i32, i32) {
    %c0_i32 = arith.constant 0 : i32
    %c0_i32_0 = arith.constant 0 : i32
    %c0_i32_1 = arith.constant 0 : i32
    return %arg1, %c0_i32, %c0_i32_0 : i32, i32, i32
  }
  func.func @transform_4(%arg0: i32, %arg1: i32) -> (i32, i32, i32) {
    %c0_i32 = arith.constant 0 : i32
    %c0_i32_0 = arith.constant 0 : i32
    %c0_i32_1 = arith.constant 0 : i32
    return %arg1, %c0_i32, %c0_i32_0 : i32, i32, i32
  }
  func.func @transform_5(%arg0: i32, %arg1: i32) -> (i32, i32, i32) {
    %c0_i32 = arith.constant 0 : i32
    %c0_i32_0 = arith.constant 0 : i32
    %c0_i32_1 = arith.constant 0 : i32
    return %arg1, %c0_i32, %c0_i32_0 : i32, i32, i32
  }
  func.func @transform_6(%arg0: i32, %arg1: i32) -> (i32, i32, i32) {
    %c0_i32 = arith.constant 0 : i32
    %c0_i32_0 = arith.constant 0 : i32
    %c0_i32_1 = arith.constant 0 : i32
    return %arg1, %c0_i32, %c0_i32_0 : i32, i32, i32
  }
  func.func @transform_7(%arg0: i32, %arg1: i32) -> (i32, i32, i32) {
    %c0_i32 = arith.constant 0 : i32
    %c0_i32_0 = arith.constant 0 : i32
    %c0_i32_1 = arith.constant 0 : i32
    return %arg1, %c0_i32, %c0_i32_0 : i32, i32, i32
  }
  func.func @transform_8(%arg0: i32, %arg1: i32) -> (i32, i32, i32) {
    %c0_i32 = arith.constant 0 : i32
    %c0_i32_0 = arith.constant 0 : i32
    %c0_i32_1 = arith.constant 0 : i32
    return %arg1, %c0_i32, %c0_i32_0 : i32, i32, i32
  }
  func.func @transform_9(%arg0: i32, %arg1: i32) -> (i32, i32, i32) {
    %c0_i32 = arith.constant 0 : i32
    %c0_i32_0 = arith.constant 0 : i32
    %c0_i32_1 = arith.constant 0 : i32
    return %arg1, %c0_i32, %c0_i32_0 : i32, i32, i32
  }
  func.func @transform_10(%arg0: i32, %arg1: i32) -> (i32, i32, i32) {
    %c0_i32 = arith.constant 0 : i32
    %c0_i32_0 = arith.constant 0 : i32
    %c0_i32_1 = arith.constant 0 : i32
    return %arg1, %c0_i32, %c0_i32_0 : i32, i32, i32
  }
  func.func @transform_11(%arg0: i32, %arg1: i32) -> (i32, i32, i32) {
    %c0_i32 = arith.constant 0 : i32
    %c0_i32_0 = arith.constant 0 : i32
    %c0_i32_1 = arith.constant 0 : i32
    return %arg1, %c0_i32, %c0_i32_0 : i32, i32, i32
  }
  func.func @transform_12(%arg0: i32, %arg1: i32) -> (i32, i32, i32) {
    %c0_i32 = arith.constant 0 : i32
    %c0_i32_0 = arith.constant 0 : i32
    %c0_i32_1 = arith.constant 0 : i32
    return %arg0, %c0_i32, %c0_i32_0 : i32, i32, i32
  }
}

</mosaic_0001>

<llo_original>
// kernel: tpu_custom_call.1
$region0: #{tpu_custom_call.1}
  #allocation0 [shape = 'u32[]', space=smem, size = 0x4, offset = 0x4, fixed_abs, tag = 'smem constant byte address 0x4 - core index']
  #allocation1 [shape = 'u32[144,128]{1,0:T(1,128)}', space=vmem, size = 0x12000, scoped, tag = 'internal scratch']
  #allocation2 [shape = 'f32[4,8,32]{2,1,0:T(8,128)}', space=vmem, size = 0x4000, scoped, tag = 'scratch operand']
  #allocation3 [shape = 'f32[4,8,32]{2,1,0:T(8,128)}', space=vmem, size = 0x4000, scoped, tag = 'scratch operand']
  #allocation4 [shape = 'f32[4,8,32]{2,1,0:T(8,128)}', space=vmem, size = 0x4000, scoped, tag = 'scratch operand']
  %s0 = inlined_call_operand.hbm [shape: f32[2,8,128], index: 0, kind: input, shape index: {}]
  %s1 = inlined_call_operand.hbm [shape: bf16[2,128,384], index: 1, kind: input, shape index: {}]
  %s2 = inlined_call_operand.hbm [shape: bf16[2,4,32,128], index: 2, kind: input, shape index: {}]
  %s3 = inlined_call_operand.hbm [shape: f32[2,1,128], index: 3, kind: input, shape index: {}]
  %s4 = inlined_call_operand.hbm [shape: bf16[2,128,512], index: 4, kind: input, shape index: {}]
  %s5 = inlined_call_operand.vmem [shape: f32[2,1,512], index: 5, kind: input, shape index: {}]
  %s6 = inlined_call_operand.hbm [shape: bf16[2,512,128], index: 6, kind: input, shape index: {}]
  %s7 = inlined_call_operand.vmem [shape: f32[2,1,128], index: 7, kind: input, shape index: {}]
  %s8 = inlined_call_operand.vmem [shape: f32[2,1,128], index: 8, kind: input, shape index: {}]
  %s9 = inlined_call_operand.vmem [shape: f32[2,1,128], index: 9, kind: input, shape index: {}]
  %s10 = inlined_call_operand.vmem [shape: f32[2,1,128], index: 10, kind: input, shape index: {}]
  %s11 = inlined_call_operand.vmem [shape: f32[2,1,128], index: 11, kind: input, shape index: {}]
  %s12 = inlined_call_operand.hbm [shape: f32[2,8,128], index: 12, kind: output, shape index: {}]
  %s13 = sld [smem:[#allocation0]]
  $region109: #{tpu_custom_call.1} parent=0
    _
  %s15 = ssub.s32 1, %s13
  %s16 = scalar_select 0, %s15, %s13
  $region1: #{tpu_custom_call.1} parent=0
    #allocation5 [shape = 'u8[8192]{0}', space=vmem, size = 0x2000, scoped, tag = 'input window, operand 0']
    #allocation6 [shape = 's32[2]{0}', space=sflag, size = 0x8, scoped, tag = 'scoped memory for tpu_custom_call.1']
    #allocation7 [shape = 's32[2]{0}', space=sflag, size = 0x8, scoped, tag = 'scoped memory for tpu_custom_call.1']
    #allocation8 [shape = 'u8[196608]{0}', space=vmem, size = 0x30000, scoped, tag = 'input window, operand 1']
    #allocation9 [shape = 's32[2]{0}', space=sflag, size = 0x8, scoped, tag = 'scoped memory for tpu_custom_call.1']
    #allocation10 [shape = 'u8[65536]{0}', space=vmem, size = 0x10000, scoped, tag = 'input window, operand 2']
    #allocation11 [shape = 'u8[1024]{0}', space=vmem, size = 0x400, scoped, tag = 'input window, operand 3']
    #allocation12 [shape = 's32[2]{0}', space=sflag, size = 0x8, scoped, tag = 'scoped memory for tpu_custom_call.1']
    #allocation13 [shape = 'u8[262144]{0}', space=vmem, size = 0x40000, scoped, tag = 'input window, operand 4']
    #allocation14 [shape = 'u8[262144]{0}', space=vmem, size = 0x40000, scoped, tag = 'input window, operand 6']
    #allocation15 [shape = 's32[2]{0}', space=sflag, size = 0x8, scoped, tag = 'scoped memory for tpu_custom_call.1']
    #allocation16 [shape = 'u8[8192]{0}', space=vmem, size = 0x2000, scoped, tag = 'output window, operand 0']
    %17 = vsyncpa [#allocation6], 0
    %s18 = scalar_lea.sflag [#allocation6], 1
    %19 = vsyncpa %s18, 0
    %20 = vsyncpa [#allocation9], 0
    %s21 = scalar_lea.sflag [#allocation9], 1
    %22 = vsyncpa %s21, 0
    %23 = vsyncpa [#allocation12], 0
    %s24 = scalar_lea.sflag [#allocation12], 1
    %25 = vsyncpa %s24, 0
    %26 = vsyncpa [#allocation15], 0
    %s27 = scalar_lea.sflag [#allocation15], 1
    %28 = vsyncpa %s27, 0
    %29 = vsyncpa [#allocation7], 0
    %s30 = scalar_lea.sflag [#allocation7], 1
    %31 = vsyncpa %s30, 0
    loop: start=0, step=1, limit=6
    $region2: #{tpu_custom_call.1} parent=1 // loop_pre_header
      _
    $region3: #{tpu_custom_call.1} parent=1 // loop_header
      %s33 = sphi 0, %s37
      %p34 = scmp.ge.s32.totalorder %s33, 6
      %s40 = sphi 0, %s52
      %s41 = sphi 0, %s48
      %s42 = sphi 0, %s40
      %s43 = sphi 0, %s41
      %s44 = sphi 0, %s42
      %s45 = sphi 0, %s43
      %s55 = sphi 0, %s57
      %s58 = sphi 0, %s55
      %s59 = sphi 0, %s58
      %s75 = sphi 0, %s59
      %s81 = sphi 0, %s83
      %s84 = sphi 0, %s81
      %s85 = sphi 0, %s84
      %s101 = sphi 0, %s85
      %s107 = sphi 0, %s109
      %s110 = sphi 0, %s107
      %s111 = sphi 0, %s110
      %s127 = sphi 0, %s111
      %s133 = sphi 0, %s135
      %s136 = sphi 0, %s133
      %s137 = sphi 0, %s136
      %s153 = sphi 0, %s137
      %s159 = sphi 0, %s161
      %s162 = sphi 0, %s159
      %s163 = sphi 0, %s162
      %s179 = sphi 0, %s163
      %s185 = sphi 0, %s187
      %s188 = sphi 0, %s185
      %s189 = sphi 0, %s188
      %s205 = sphi 0, %s189
      %s211 = sphi 0, %s213
      %s214 = sphi 0, %s211
      %s215 = sphi 0, %s214
      %s231 = sphi 0, %s215
      %s237 = sphi 0, %s239
      %s240 = sphi 0, %s237
      %s241 = sphi 0, %s240
      %s257 = sphi 0, %s241
      %s263 = sphi 0, %s265
      %s266 = sphi 0, %s263
      %s267 = sphi 0, %s266
      %s283 = sphi 0, %s267
      %s289 = sphi 0, %s291
      %s292 = sphi 0, %s289
      %s293 = sphi 0, %s292
      %s309 = sphi 0, %s293
      %s315 = sphi 0, %s317
      %s318 = sphi 0, %s315
      %s319 = sphi 0, %s318
      %s335 = sphi 0, %s319
      %s341 = sphi 0, %s343
      %s344 = sphi 0, %s341
      %s345 = sphi 0, %s344
      %s361 = sphi 0, %s345
      %s367 = sphi 0, %s369
      %s370 = sphi 0, %s367
      %s371 = sphi 0, %s370
      %s387 = sphi 0, %s371
    $region4: #{tpu_custom_call.1} parent=1 // loop_header_branch
      %36 = sbr.rel (%p34) target = $region8
    $region5: #{tpu_custom_call.1} parent=1 // loop_body
      %s38 = ssub.s32 %s33, 1
      %s39 = ssub.s32 %s33, 2
      %s46 = sadd.s32 1, %s41
      %p47 = scmp.ge.s32.totalorder %s46, 2
      %s48 = scalar_select %p47, 0, %s46
      %s49 = sadd.s32 1, %s40
      %s50 = scalar_select %p47, %s49, %s40
      %p51 = scmp.ge.s32.totalorder %s50, 2
      %s52 = scalar_select %p51, 0, %s50
      %s53 = ssub.s32 %s40, %s52
      %p54 = scmp.eq.s32.totalorder %s53, 0
      %s56 = sadd.s32 %s55, 1
      %s57 = scalar_select %p54, %s55, %s56
      %p60 = pneg %p54
      %p61 = scmp.eq.s32.totalorder %s33, 3
      %p62 = por %p60, %p61
      %p63 = scmp.ne.s32.totalorder %s55, %s58
      %p64 = scmp.eq.s32.totalorder %s33, 0
      %p65 = por %p63, %p64
      %p66 = scmp.ne.s32.totalorder %s55, %s58
      %p67 = scmp.eq.s32.totalorder %s38, 3
      %p68 = por %p66, %p67
      %p69 = scmp.ne.s32.totalorder %s58, %s59
      %p70 = scmp.eq.s32.totalorder %s38, 0
      %p71 = por %p69, %p70
      %p72 = scmp.ne.s32.totalorder %s58, %s59
      %p73 = scmp.eq.s32.totalorder %s39, 3
      %p74 = por %p72, %p73
      %p76 = scmp.ne.s32.totalorder %s59, %s75
      %p77 = scmp.eq.s32.totalorder %s39, 0
      %p78 = por %p76, %p77
      %s79 = ssub.s32 %s41, %s48
      %p80 = scmp.eq.s32.totalorder %s79, 0
      %s82 = sadd.s32 %s81, 1
      %s83 = scalar_select %p80, %s81, %s82
      %p86 = pneg %p80
      %p87 = scmp.eq.s32.totalorder %s33, 3
      %p88 = por %p86, %p87
      %p89 = scmp.ne.s32.totalorder %s81, %s84
      %p90 = scmp.eq.s32.totalorder %s33, 0
      %p91 = por %p89, %p90
      %p92 = scmp.ne.s32.totalorder %s81, %s84
      %p93 = scmp.eq.s32.totalorder %s38, 3
      %p94 = por %p92, %p93
      %p95 = scmp.ne.s32.totalorder %s84, %s85
      %p96 = scmp.eq.s32.totalorder %s38, 0
      %p97 = por %p95, %p96
      %p98 = scmp.ne.s32.totalorder %s84, %s85
      %p99 = scmp.eq.s32.totalorder %s39, 3
      %p100 = por %p98, %p99
      %p102 = scmp.ne.s32.totalorder %s85, %s101
      %p103 = scmp.eq.s32.totalorder %s39, 0
      %p104 = por %p102, %p103
      %s105 = ssub.s32 %s41, %s48
      %p106 = scmp.eq.s32.totalorder %s105, 0
      %s108 = sadd.s32 %s107, 1
      %s109 = scalar_select %p106, %s107, %s108
      %p112 = pneg %p106
      %p113 = scmp.eq.s32.totalorder %s33, 3
      %p114 = por %p112, %p113
      %p115 = scmp.ne.s32.totalorder %s107, %s110
      %p116 = scmp.eq.s32.totalorder %s33, 0
      %p117 = por %p115, %p116
      %p118 = scmp.ne.s32.totalorder %s107, %s110
      %p119 = scmp.eq.s32.totalorder %s38, 3
      %p120 = por %p118, %p119
      %p121 = scmp.ne.s32.totalorder %s110, %s111
      %p122 = scmp.eq.s32.totalorder %s38, 0
      %p123 = por %p121, %p122
      %p124 = scmp.ne.s32.totalorder %s110, %s111
      %p125 = scmp.eq.s32.totalorder %s39, 3
      %p126 = por %p124, %p125
      %p128 = scmp.ne.s32.totalorder %s111, %s127
      %p129 = scmp.eq.s32.totalorder %s39, 0
      %p130 = por %p128, %p129
      %s131 = ssub.s32 %s41, %s48
      %p132 = scmp.eq.s32.totalorder %s131, 0
      %s134 = sadd.s32 %s133, 1
      %s135 = scalar_select %p132, %s133, %s134
      %p138 = pneg %p132
      %p139 = scmp.eq.s32.totalorder %s33, 3
      %p140 = por %p138, %p139
      %p141 = scmp.ne.s32.totalorder %s133, %s136
      %p142 = scmp.eq.s32.totalorder %s33, 0
      %p143 = por %p141, %p142
      %p144 = scmp.ne.s32.totalorder %s133, %s136
      %p145 = scmp.eq.s32.totalorder %s38, 3
      %p146 = por %p144, %p145
      %p147 = scmp.ne.s32.totalorder %s136, %s137
      %p148 = scmp.eq.s32.totalorder %s38, 0
      %p149 = por %p147, %p148
      %p150 = scmp.ne.s32.totalorder %s136, %s137
      %p151 = scmp.eq.s32.totalorder %s39, 3
      %p152 = por %p150, %p151
      %p154 = scmp.ne.s32.totalorder %s137, %s153
      %p155 = scmp.eq.s32.totalorder %s39, 0
      %p156 = por %p154, %p155
      %s157 = ssub.s32 %s41, %s48
      %p158 = scmp.eq.s32.totalorder %s157, 0
      %s160 = sadd.s32 %s159, 1
      %s161 = scalar_select %p158, %s159, %s160
      %p164 = pneg %p158
      %p165 = scmp.eq.s32.totalorder %s33, 3
      %p166 = por %p164, %p165
      %p167 = scmp.ne.s32.totalorder %s159, %s162
      %p168 = scmp.eq.s32.totalorder %s33, 0
      %p169 = por %p167, %p168
      %p170 = scmp.ne.s32.totalorder %s159, %s162
      %p171 = scmp.eq.s32.totalorder %s38, 3
      %p172 = por %p170, %p171
      %p173 = scmp.ne.s32.totalorder %s162, %s163
      %p174 = scmp.eq.s32.totalorder %s38, 0
      %p175 = por %p173, %p174
      %p176 = scmp.ne.s32.totalorder %s162, %s163
      %p177 = scmp.eq.s32.totalorder %s39, 3
      %p178 = por %p176, %p177
      %p180 = scmp.ne.s32.totalorder %s163, %s179
      %p181 = scmp.eq.s32.totalorder %s39, 0
      %p182 = por %p180, %p181
      %s183 = ssub.s32 %s41, %s48
      %p184 = scmp.eq.s32.totalorder %s183, 0
      %s186 = sadd.s32 %s185, 1
      %s187 = scalar_select %p184, %s185, %s186
      %p190 = pneg %p184
      %p191 = scmp.eq.s32.totalorder %s33, 3
      %p192 = por %p190, %p191
      %p193 = scmp.ne.s32.totalorder %s185, %s188
      %p194 = scmp.eq.s32.totalorder %s33, 0
      %p195 = por %p193, %p194
      %p196 = scmp.ne.s32.totalorder %s185, %s188
      %p197 = scmp.eq.s32.totalorder %s38, 3
      %p198 = por %p196, %p197
      %p199 = scmp.ne.s32.totalorder %s188, %s189
      %p200 = scmp.eq.s32.totalorder %s38, 0
      %p201 = por %p199, %p200
      %p202 = scmp.ne.s32.totalorder %s188, %s189
      %p203 = scmp.eq.s32.totalorder %s39, 3
      %p204 = por %p202, %p203
      %p206 = scmp.ne.s32.totalorder %s189, %s205
      %p207 = scmp.eq.s32.totalorder %s39, 0
      %p208 = por %p206, %p207
      %s209 = ssub.s32 %s41, %s48
      %p210 = scmp.eq.s32.totalorder %s209, 0
      %s212 = sadd.s32 %s211, 1
      %s213 = scalar_select %p210, %s211, %s212
      %p216 = pneg %p210
      %p217 = scmp.eq.s32.totalorder %s33, 3
      %p218 = por %p216, %p217
      %p219 = scmp.ne.s32.totalorder %s211, %s214
      %p220 = scmp.eq.s32.totalorder %s33, 0
      %p221 = por %p219, %p220
      %p222 = scmp.ne.s32.totalorder %s211, %s214
      %p223 = scmp.eq.s32.totalorder %s38, 3
      %p224 = por %p222, %p223
      %p225 = scmp.ne.s32.totalorder %s214, %s215
      %p226 = scmp.eq.s32.totalorder %s38, 0
      %p227 = por %p225, %p226
      %p228 = scmp.ne.s32.totalorder %s214, %s215
      %p229 = scmp.eq.s32.totalorder %s39, 3
      %p230 = por %p228, %p229
      %p232 = scmp.ne.s32.totalorder %s215, %s231
      %p233 = scmp.eq.s32.totalorder %s39, 0
      %p234 = por %p232, %p233
      %s235 = ssub.s32 %s41, %s48
      %p236 = scmp.eq.s32.totalorder %s235, 0
      %s238 = sadd.s32 %s237, 1
      %s239 = scalar_select %p236, %s237, %s238
      %p242 = pneg %p236
      %p243 = scmp.eq.s32.totalorder %s33, 3
      %p244 = por %p242, %p243
      %p245 = scmp.ne.s32.totalorder %s237, %s240
      %p246 = scmp.eq.s32.totalorder %s33, 0
      %p247 = por %p245, %p246
      %p248 = scmp.ne.s32.totalorder %s237, %s240
      %p249 = scmp.eq.s32.totalorder %s38, 3
      %p250 = por %p248, %p249
      %p251 = scmp.ne.s32.totalorder %s240, %s241
      %p252 = scmp.eq.s32.totalorder %s38, 0
      %p253 = por %p251, %p252
      %p254 = scmp.ne.s32.totalorder %s240, %s241
      %p255 = scmp.eq.s32.totalorder %s39, 3
      %p256 = por %p254, %p255
      %p258 = scmp.ne.s32.totalorder %s241, %s257
      %p259 = scmp.eq.s32.totalorder %s39, 0
      %p260 = por %p258, %p259
      %s261 = ssub.s32 %s41, %s48
      %p262 = scmp.eq.s32.totalorder %s261, 0
      %s264 = sadd.s32 %s263, 1
      %s265 = scalar_select %p262, %s263, %s264
      %p268 = pneg %p262
      %p269 = scmp.eq.s32.totalorder %s33, 3
      %p270 = por %p268, %p269
      %p271 = scmp.ne.s32.totalorder %s263, %s266
      %p272 = scmp.eq.s32.totalorder %s33, 0
      %p273 = por %p271, %p272
      %p274 = scmp.ne.s32.totalorder %s263, %s266
      %p275 = scmp.eq.s32.totalorder %s38, 3
      %p276 = por %p274, %p275
      %p277 = scmp.ne.s32.totalorder %s266, %s267
      %p278 = scmp.eq.s32.totalorder %s38, 0
      %p279 = por %p277, %p278
      %p280 = scmp.ne.s32.totalorder %s266, %s267
      %p281 = scmp.eq.s32.totalorder %s39, 3
      %p282 = por %p280, %p281
      %p284 = scmp.ne.s32.totalorder %s267, %s283
      %p285 = scmp.eq.s32.totalorder %s39, 0
      %p286 = por %p284, %p285
      %s287 = ssub.s32 %s41, %s48
      %p288 = scmp.eq.s32.totalorder %s287, 0
      %s290 = sadd.s32 %s289, 1
      %s291 = scalar_select %p288, %s289, %s290
      %p294 = pneg %p288
      %p295 = scmp.eq.s32.totalorder %s33, 3
      %p296 = por %p294, %p295
      %p297 = scmp.ne.s32.totalorder %s289, %s292
      %p298 = scmp.eq.s32.totalorder %s33, 0
      %p299 = por %p297, %p298
      %p300 = scmp.ne.s32.totalorder %s289, %s292
      %p301 = scmp.eq.s32.totalorder %s38, 3
      %p302 = por %p300, %p301
      %p303 = scmp.ne.s32.totalorder %s292, %s293
      %p304 = scmp.eq.s32.totalorder %s38, 0
      %p305 = por %p303, %p304
      %p306 = scmp.ne.s32.totalorder %s292, %s293
      %p307 = scmp.eq.s32.totalorder %s39, 3
      %p308 = por %p306, %p307
      %p310 = scmp.ne.s32.totalorder %s293, %s309
      %p311 = scmp.eq.s32.totalorder %s39, 0
      %p312 = por %p310, %p311
      %s313 = ssub.s32 %s41, %s48
      %p314 = scmp.eq.s32.totalorder %s313, 0
      %s316 = sadd.s32 %s315, 1
      %s317 = scalar_select %p314, %s315, %s316
      %p320 = pneg %p314
      %p321 = scmp.eq.s32.totalorder %s33, 3
      %p322 = por %p320, %p321
      %p323 = scmp.ne.s32.totalorder %s315, %s318
      %p324 = scmp.eq.s32.totalorder %s33, 0
      %p325 = por %p323, %p324
      %p326 = scmp.ne.s32.totalorder %s315, %s318
      %p327 = scmp.eq.s32.totalorder %s38, 3
      %p328 = por %p326, %p327
      %p329 = scmp.ne.s32.totalorder %s318, %s319
      %p330 = scmp.eq.s32.totalorder %s38, 0
      %p331 = por %p329, %p330
      %p332 = scmp.ne.s32.totalorder %s318, %s319
      %p333 = scmp.eq.s32.totalorder %s39, 3
      %p334 = por %p332, %p333
      %p336 = scmp.ne.s32.totalorder %s319, %s335
      %p337 = scmp.eq.s32.totalorder %s39, 0
      %p338 = por %p336, %p337
      %s339 = ssub.s32 %s41, %s48
      %p340 = scmp.eq.s32.totalorder %s339, 0
      %s342 = sadd.s32 %s341, 1
      %s343 = scalar_select %p340, %s341, %s342
      %p346 = pneg %p340
      %p347 = scmp.eq.s32.totalorder %s33, 3
      %p348 = por %p346, %p347
      %p349 = scmp.ne.s32.totalorder %s341, %s344
      %p350 = scmp.eq.s32.totalorder %s33, 0
      %p351 = por %p349, %p350
      %p352 = scmp.ne.s32.totalorder %s341, %s344
      %p353 = scmp.eq.s32.totalorder %s38, 3
      %p354 = por %p352, %p353
      %p355 = scmp.ne.s32.totalorder %s344, %s345
      %p356 = scmp.eq.s32.totalorder %s38, 0
      %p357 = por %p355, %p356
      %p358 = scmp.ne.s32.totalorder %s344, %s345
      %p359 = scmp.eq.s32.totalorder %s39, 3
      %p360 = por %p358, %p359
      %p362 = scmp.ne.s32.totalorder %s345, %s361
      %p363 = scmp.eq.s32.totalorder %s39, 0
      %p364 = por %p362, %p363
      %s365 = ssub.s32 %s40, %s52
      %p366 = scmp.eq.s32.totalorder %s365, 0
      %s368 = sadd.s32 %s367, 1
      %s369 = scalar_select %p366, %s367, %s368
      %p372 = pneg %p366
      %p373 = scmp.eq.s32.totalorder %s33, 3
      %p374 = por %p372, %p373
      %p375 = scmp.ne.s32.totalorder %s367, %s370
      %p376 = scmp.eq.s32.totalorder %s33, 0
      %p377 = por %p375, %p376
      %p378 = scmp.ne.s32.totalorder %s367, %s370
      %p379 = scmp.eq.s32.totalorder %s38, 3
      %p380 = por %p378, %p379
      %p381 = scmp.ne.s32.totalorder %s370, %s371
      %p382 = scmp.eq.s32.totalorder %s38, 0
      %p383 = por %p381, %p382
      %p384 = scmp.ne.s32.totalorder %s370, %s371
      %p385 = scmp.eq.s32.totalorder %s39, 3
      %p386 = por %p384, %p385
      %p388 = scmp.ne.s32.totalorder %s371, %s387
      %p389 = scmp.eq.s32.totalorder %s39, 0
      %p390 = por %p388, %p389
      %p391 = scmp.le.s32.totalorder 1, %s33
      %p392 = scmp.lt.s32.totalorder %s33, 5
      %p393 = pnand %p391, %p392
      %p394 = pneg %p393
      // Predicated region
      $region9: #{tpu_custom_call.1} parent=5 // pred_check
        _
      $region10: #{tpu_custom_call.1} parent=5 // pred_check_branch
        %396 = sbr.rel (%p393) target = $region12
      $region11: #{tpu_custom_call.1} parent=5 // pred_region
        %s397 = ssub.s32 %s33, 1
      $region12: #{tpu_custom_call.1} parent=5 // pred_fallthru
        _
      %p398 = scmp.lt.s32.totalorder %s33, 4
      // Predicated region
      $region13: #{tpu_custom_call.1} parent=5 // pred_check
        %p399 = pneg %p398
      $region14: #{tpu_custom_call.1} parent=5 // pred_check_branch
        %401 = sbr.rel (%p399) target = $region16
      $region15: #{tpu_custom_call.1} parent=5 // pred_region
        // Predicated region
        $region17: #{tpu_custom_call.1} parent=15 // pred_check
          %p402 = pneg %p65
        $region18: #{tpu_custom_call.1} parent=15 // pred_check_branch
          %404 = sbr.rel (%p402) target = $region20
        $region19: #{tpu_custom_call.1} parent=15 // pred_region
          %s405 = sand.u32 %s55, 1
          %s406 = scalar_lea.sflag [#allocation6], %s405
          %s407 = sand.u32 %s55, 1
          %s408 = smul.addr %s407, 8
          %s409 = scalar_lea.vmem [#allocation5], %s408
          %s411 = ssub.s32 128, 128
          %412 = vsyncadd %s406, %s411
          %s413 = smul.addr %s40, 128
          %s414 = scalar_lea.hbm %s0, %s413
          %s416 = sshll.u32 %s409, 4
          %s417 = int_to_ptr.vmem [resolvable:$true] %s416
          %419 = dma.hbm_to_vmem [thread:$0]  %s414, 128, %s417, %s406
        $region20: #{tpu_custom_call.1} parent=15 // pred_fallthru
          _
        // Predicated region
        $region21: #{tpu_custom_call.1} parent=15 // pred_check
          %p420 = pneg %p91
        $region22: #{tpu_custom_call.1} parent=15 // pred_check_branch
          %422 = sbr.rel (%p420) target = $region24
        $region23: #{tpu_custom_call.1} parent=15 // pred_region
          %s423 = sand.u32 %s33, 1
          %s424 = scalar_lea.sflag [#allocation9], %s423
          %s425 = sand.u32 %s81, 1
          %s426 = smul.addr %s425, 192
          %s427 = scalar_lea.vmem [#allocation8], %s426
          %s429 = ssub.s32 3072, 3072
          %430 = vsyncadd %s424, %s429
          %s431 = smul.addr %s41, 48
          %s432 = smul.addr %s431, 64
          %s433 = scalar_lea.hbm %s1, %s432
          %s434 = sshll.u32 %s427, 4
          %s435 = int_to_ptr.vmem [resolvable:$true] %s434
          %440 = dma.hbm_to_vmem [thread:$0]  %s433, 3072, %s435, %s424, 192, 192, 12
        $region24: #{tpu_custom_call.1} parent=15 // pred_fallthru
          _
        // Predicated region
        $region25: #{tpu_custom_call.1} parent=15 // pred_check
          %p441 = pneg %p117
        $region26: #{tpu_custom_call.1} parent=15 // pred_check_branch
          %443 = sbr.rel (%p441) target = $region28
        $region27: #{tpu_custom_call.1} parent=15 // pred_region
          %s444 = sand.u32 %s33, 1
          %s445 = scalar_lea.sflag [#allocation9], %s444
          %s446 = sand.u32 %s107, 1
          %s447 = smul.addr %s446, 64
          %s448 = scalar_lea.vmem [#allocation10], %s447
          %s450 = ssub.s32 1024, 1024
          %451 = vsyncadd %s445, %s450
          %s452 = smul.addr %s41, 16
          %s453 = smul.addr %s452, 64
          %s454 = scalar_lea.hbm %s2, %s453
          %s455 = sshll.u32 %s448, 4
          %s456 = int_to_ptr.vmem [resolvable:$true] %s455
          %461 = dma.hbm_to_vmem [thread:$0]  %s454, 1024, %s456, %s445, 64, 64, 4
        $region28: #{tpu_custom_call.1} parent=15 // pred_fallthru
          _
        // Predicated region
        $region29: #{tpu_custom_call.1} parent=15 // pred_check
          %p462 = pneg %p143
        $region30: #{tpu_custom_call.1} parent=15 // pred_check_branch
          %464 = sbr.rel (%p462) target = $region32
        $region31: #{tpu_custom_call.1} parent=15 // pred_region
          %s465 = sand.u32 %s33, 1
          %s466 = scalar_lea.sflag [#allocation12], %s465
          %s467 = sand.u32 %s133, 1
          %s468 = scalar_lea.vmem [#allocation11], %s467
          %s470 = ssub.s32 16, 16
          %471 = vsyncadd %s466, %s470
          %s472 = smul.addr %s41, 16
          %s473 = scalar_lea.hbm %s3, %s472
          %s475 = sshll.u32 %s468, 4
          %s476 = int_to_ptr.vmem [resolvable:$true] %s475
          %478 = dma.hbm_to_vmem [thread:$0]  %s473, 16, %s476, %s466
        $region32: #{tpu_custom_call.1} parent=15 // pred_fallthru
          _
        // Predicated region
        $region33: #{tpu_custom_call.1} parent=15 // pred_check
          %p479 = pneg %p169
        $region34: #{tpu_custom_call.1} parent=15 // pred_check_branch
          %481 = sbr.rel (%p479) target = $region36
        $region35: #{tpu_custom_call.1} parent=15 // pred_region
          %s482 = sand.u32 %s33, 1
          %s483 = scalar_lea.sflag [#allocation12], %s482
          %s484 = sand.u32 %s159, 1
          %s485 = smul.addr %s484, 256
          %s486 = scalar_lea.vmem [#allocation13], %s485
          %s488 = ssub.s32 4096, 4096
          %489 = vsyncadd %s483, %s488
          %s490 = smul.addr %s41, 64
          %s491 = smul.addr %s490, 64
          %s492 = scalar_lea.hbm %s4, %s491
          %s493 = sshll.u32 %s486, 4
          %s494 = int_to_ptr.vmem [resolvable:$true] %s493
          %499 = dma.hbm_to_vmem [thread:$0]  %s492, 4096, %s494, %s483, 256, 256, 16
        $region36: #{tpu_custom_call.1} parent=15 // pred_fallthru
          _
        // Predicated region
        $region37: #{tpu_custom_call.1} parent=15 // pred_check
          %p500 = pneg %p195
        $region38: #{tpu_custom_call.1} parent=15 // pred_check_branch
          %502 = sbr.rel (%p500) target = $region40
        $region39: #{tpu_custom_call.1} parent=15 // pred_region
          %p503 = scmp.lt.s32.totalorder %s41, 1
          %s504 = scalar_select %p503, %s41, 1
          %s505 = smul.addr %s504, 4
          %s506 = scalar_lea.vmem %s5, %s505
        $region40: #{tpu_custom_call.1} parent=15 // pred_fallthru
          _
        // Predicated region
        $region41: #{tpu_custom_call.1} parent=15 // pred_check
          %p507 = pneg %p221
        $region42: #{tpu_custom_call.1} parent=15 // pred_check_branch
          %509 = sbr.rel (%p507) target = $region44
        $region43: #{tpu_custom_call.1} parent=15 // pred_region
          %s510 = sand.u32 %s211, 1
          %s511 = scalar_lea.sflag [#allocation15], %s510
          %s512 = sand.u32 %s211, 1
          %s513 = smul.addr %s512, 256
          %s514 = scalar_lea.vmem [#allocation14], %s513
          %s516 = ssub.s32 4096, 4096
          %517 = vsyncadd %s511, %s516
          %s518 = smul.addr %s41, 64
          %s519 = smul.addr %s518, 64
          %s520 = scalar_lea.hbm %s6, %s519
          %s521 = sshll.u32 %s514, 4
          %s522 = int_to_ptr.vmem [resolvable:$true] %s521
          %527 = dma.hbm_to_vmem [thread:$0]  %s520, 4096, %s522, %s511, 64, 64, 4
        $region44: #{tpu_custom_call.1} parent=15 // pred_fallthru
          _
        // Predicated region
        $region45: #{tpu_custom_call.1} parent=15 // pred_check
          %p528 = pneg %p247
        $region46: #{tpu_custom_call.1} parent=15 // pred_check_branch
          %530 = sbr.rel (%p528) target = $region48
        $region47: #{tpu_custom_call.1} parent=15 // pred_region
          %p531 = scmp.lt.s32.totalorder %s41, 1
          %s532 = scalar_select %p531, %s41, 1
          %s533 = scalar_lea.vmem %s7, %s532
        $region48: #{tpu_custom_call.1} parent=15 // pred_fallthru
          _
        // Predicated region
        $region49: #{tpu_custom_call.1} parent=15 // pred_check
          %p534 = pneg %p273
        $region50: #{tpu_custom_call.1} parent=15 // pred_check_branch
          %536 = sbr.rel (%p534) target = $region52
        $region51: #{tpu_custom_call.1} parent=15 // pred_region
          %p537 = scmp.lt.s32.totalorder %s41, 1
          %s538 = scalar_select %p537, %s41, 1
          %s539 = scalar_lea.vmem %s8, %s538
        $region52: #{tpu_custom_call.1} parent=15 // pred_fallthru
          _
        // Predicated region
        $region53: #{tpu_custom_call.1} parent=15 // pred_check
          %p540 = pneg %p299
        $region54: #{tpu_custom_call.1} parent=15 // pred_check_branch
          %542 = sbr.rel (%p540) target = $region56
        $region55: #{tpu_custom_call.1} parent=15 // pred_region
          %p543 = scmp.lt.s32.totalorder %s41, 1
          %s544 = scalar_select %p543, %s41, 1
          %s545 = scalar_lea.vmem %s9, %s544
        $region56: #{tpu_custom_call.1} parent=15 // pred_fallthru
          _
        // Predicated region
        $region57: #{tpu_custom_call.1} parent=15 // pred_check
          %p546 = pneg %p325
        $region58: #{tpu_custom_call.1} parent=15 // pred_check_branch
          %548 = sbr.rel (%p546) target = $region60
        $region59: #{tpu_custom_call.1} parent=15 // pred_region
          %p549 = scmp.lt.s32.totalorder %s41, 1
          %s550 = scalar_select %p549, %s41, 1
          %s551 = scalar_lea.vmem %s10, %s550
        $region60: #{tpu_custom_call.1} parent=15 // pred_fallthru
          _
        // Predicated region
        $region61: #{tpu_custom_call.1} parent=15 // pred_check
          %p552 = pneg %p351
        $region62: #{tpu_custom_call.1} parent=15 // pred_check_branch
          %554 = sbr.rel (%p552) target = $region64
        $region63: #{tpu_custom_call.1} parent=15 // pred_region
          %p555 = scmp.lt.s32.totalorder %s41, 1
          %s556 = scalar_select %p555, %s41, 1
          %s557 = scalar_lea.vmem %s11, %s556
        $region64: #{tpu_custom_call.1} parent=15 // pred_fallthru
          _
      $region16: #{tpu_custom_call.1} parent=5 // pred_fallthru
        _
      %p558 = scmp.le.s32.totalorder 1, %s33
      %p559 = scmp.lt.s32.totalorder %s33, 5
      %p560 = pnand %p558, %p559
      %p561 = pneg %p560
      // Predicated region
      $region65: #{tpu_custom_call.1} parent=5 // pred_check
        _
      $region66: #{tpu_custom_call.1} parent=5 // pred_check_branch
        %563 = sbr.rel (%p560) target = $region68
      $region67: #{tpu_custom_call.1} parent=5 // pred_region
        %s564 = ssub.s32 %s33, 1
        %s565 = sand.u32 %s58, 1
        %s566 = scalar_lea.sflag [#allocation6], %s565
        %s567 = sand.u32 %s58, 1
        %s568 = smul.addr %s567, 8
        %s569 = scalar_lea.vmem [#allocation5], %s568
        // Predicated region
        $region69: #{tpu_custom_call.1} parent=67 // pred_check
          %p570 = pneg %p71
        $region70: #{tpu_custom_call.1} parent=67 // pred_check_branch
          %572 = sbr.rel (%p570) target = $region72
        $region71: #{tpu_custom_call.1} parent=67 // pred_region
          %573 = dma.done %s566, 128
        $region72: #{tpu_custom_call.1} parent=67 // pred_fallthru
          _
        %s574 = sand.u32 %s38, 1
        %s575 = scalar_lea.sflag [#allocation9], %s574
        %s576 = sand.u32 %s84, 1
        %s577 = smul.addr %s576, 192
        %s578 = scalar_lea.vmem [#allocation8], %s577
        // Predicated region
        $region73: #{tpu_custom_call.1} parent=67 // pred_check
          %p579 = pneg %p97
        $region74: #{tpu_custom_call.1} parent=67 // pred_check_branch
          %581 = sbr.rel (%p579) target = $region76
        $region75: #{tpu_custom_call.1} parent=67 // pred_region
          %582 = dma.done %s575, 3072
        $region76: #{tpu_custom_call.1} parent=67 // pred_fallthru
          _
        %s583 = sand.u32 %s38, 1
        %s584 = scalar_lea.sflag [#allocation9], %s583
        %s585 = sand.u32 %s110, 1
        %s586 = smul.addr %s585, 64
        %s587 = scalar_lea.vmem [#allocation10], %s586
        // Predicated region
        $region77: #{tpu_custom_call.1} parent=67 // pred_check
          %p588 = pneg %p123
        $region78: #{tpu_custom_call.1} parent=67 // pred_check_branch
          %590 = sbr.rel (%p588) target = $region80
        $region79: #{tpu_custom_call.1} parent=67 // pred_region
          %591 = dma.done %s584, 1024
        $region80: #{tpu_custom_call.1} parent=67 // pred_fallthru
          _
        %s592 = sand.u32 %s38, 1
        %s593 = scalar_lea.sflag [#allocation12], %s592
        %s594 = sand.u32 %s136, 1
        %s595 = scalar_lea.vmem [#allocation11], %s594
        // Predicated region
        $region81: #{tpu_custom_call.1} parent=67 // pred_check
          %p596 = pneg %p149
        $region82: #{tpu_custom_call.1} parent=67 // pred_check_branch
          %598 = sbr.rel (%p596) target = $region84
        $region83: #{tpu_custom_call.1} parent=67 // pred_region
          %599 = dma.done %s593, 16
        $region84: #{tpu_custom_call.1} parent=67 // pred_fallthru
          _
        %s600 = sand.u32 %s38, 1
        %s601 = scalar_lea.sflag [#allocation12], %s600
        %s602 = sand.u32 %s162, 1
        %s603 = smul.addr %s602, 256
        %s604 = scalar_lea.vmem [#allocation13], %s603
        // Predicated region
        $region85: #{tpu_custom_call.1} parent=67 // pred_check
          %p605 = pneg %p175
        $region86: #{tpu_custom_call.1} parent=67 // pred_check_branch
          %607 = sbr.rel (%p605) target = $region88
        $region87: #{tpu_custom_call.1} parent=67 // pred_region
          %608 = dma.done %s601, 4096
        $region88: #{tpu_custom_call.1} parent=67 // pred_fallthru
          _
        %s609 = sand.u32 %s214, 1
        %s610 = scalar_lea.sflag [#allocation15], %s609
        %s611 = sand.u32 %s214, 1
        %s612 = smul.addr %s611, 256
        %s613 = scalar_lea.vmem [#allocation14], %s612
        // Predicated region
        $region89: #{tpu_custom_call.1} parent=67 // pred_check
          %p614 = pneg %p227
        $region90: #{tpu_custom_call.1} parent=67 // pred_check_branch
          %616 = sbr.rel (%p614) target = $region92
        $region91: #{tpu_custom_call.1} parent=67 // pred_region
          %617 = dma.done %s610, 4096
        $region92: #{tpu_custom_call.1} parent=67 // pred_fallthru
          _
        %s618 = sand.u32 %s58, 1
        %s619 = scalar_lea.sflag [#allocation6], %s618
        %s620 = sand.u32 %s58, 1
        %s621 = smul.addr %s620, 8
        %s622 = scalar_lea.vmem [#allocation5], %s621
        %p623 = pneg %p71
        %p624 = pneg %p68
        %s625 = sand.u32 %s38, 1
        %s626 = scalar_lea.sflag [#allocation9], %s625
        %s627 = sand.u32 %s84, 1
        %s628 = smul.addr %s627, 192
        %s629 = scalar_lea.vmem [#allocation8], %s628
        %p630 = pneg %p97
        %p631 = pneg %p94
        %s632 = sand.u32 %s38, 1
        %s633 = scalar_lea.sflag [#allocation9], %s632
        %s634 = sand.u32 %s110, 1
        %s635 = smul.addr %s634, 64
        %s636 = scalar_lea.vmem [#allocation10], %s635
        %p637 = pneg %p123
        %p638 = pneg %p120
        %s639 = sand.u32 %s38, 1
        %s640 = scalar_lea.sflag [#allocation12], %s639
        %s641 = sand.u32 %s136, 1
        %s642 = scalar_lea.vmem [#allocation11], %s641
        %p643 = pneg %p149
        %p644 = pneg %p146
        %s645 = sand.u32 %s38, 1
        %s646 = scalar_lea.sflag [#allocation12], %s645
        %s647 = sand.u32 %s162, 1
        %s648 = smul.addr %s647, 256
        %s649 = scalar_lea.vmem [#allocation13], %s648
        %p650 = pneg %p175
        %p651 = pneg %p172
        %p652 = scmp.lt.s32.totalorder %s43, 1
        %s653 = scalar_select %p652, %s43, 1
        %s654 = smul.addr %s653, 4
        %s655 = scalar_lea.vmem %s5, %s654
        %p656 = pneg %p201
        %p657 = pneg %p198
        %s658 = sand.u32 %s214, 1
        %s659 = scalar_lea.sflag [#allocation15], %s658
        %s660 = sand.u32 %s214, 1
        %s661 = smul.addr %s660, 256
        %s662 = scalar_lea.vmem [#allocation14], %s661
        %p663 = pneg %p227
        %p664 = pneg %p224
        %p665 = scmp.lt.s32.totalorder %s43, 1
        %s666 = scalar_select %p665, %s43, 1
        %s667 = scalar_lea.vmem %s7, %s666
        %p668 = pneg %p253
        %p669 = pneg %p250
        %p670 = scmp.lt.s32.totalorder %s43, 1
        %s671 = scalar_select %p670, %s43, 1
        %s672 = scalar_lea.vmem %s8, %s671
        %p673 = pneg %p279
        %p674 = pneg %p276
        %p675 = scmp.lt.s32.totalorder %s43, 1
        %s676 = scalar_select %p675, %s43, 1
        %s677 = scalar_lea.vmem %s9, %s676
        %p678 = pneg %p305
        %p679 = pneg %p302
        %p680 = scmp.lt.s32.totalorder %s43, 1
        %s681 = scalar_select %p680, %s43, 1
        %s682 = scalar_lea.vmem %s10, %s681
        %p683 = pneg %p331
        %p684 = pneg %p328
        %p685 = scmp.lt.s32.totalorder %s43, 1
        %s686 = scalar_select %p685, %s43, 1
        %s687 = scalar_lea.vmem %s11, %s686
        %p688 = pneg %p357
        %p689 = pneg %p354
        %p690 = pneg %p383
        %p691 = pneg %p380
        %s692 = sand.u32 %s370, 1
        %s693 = scalar_lea.sflag [#allocation7], %s692
        %s694 = sand.u32 %s370, 1
        %s695 = smul.addr %s694, 8
        %s696 = scalar_lea.vmem [#allocation16], %s695
        %p697 = scmp.lt.s32.totalorder %s43, 1
        %s698 = scalar_select %p697, %s43, 1
        %s699 = smul.addr %s698, 4
        %s700 = scalar_lea.vmem %s5, %s699
        %p701 = scmp.lt.s32.totalorder %s43, 1
        %s702 = scalar_select %p701, %s43, 1
        %s703 = scalar_lea.vmem %s7, %s702
        %p704 = scmp.lt.s32.totalorder %s43, 1
        %s705 = scalar_select %p704, %s43, 1
        %s706 = scalar_lea.vmem %s8, %s705
        %p707 = scmp.lt.s32.totalorder %s43, 1
        %s708 = scalar_select %p707, %s43, 1
        %s709 = scalar_lea.vmem %s9, %s708
        %p710 = scmp.lt.s32.totalorder %s43, 1
        %s711 = scalar_select %p710, %s43, 1
        %s712 = scalar_lea.vmem %s10, %s711
        %p713 = scmp.lt.s32.totalorder %s43, 1
        %s714 = scalar_select %p713, %s43, 1
        %s715 = scalar_lea.vmem %s11, %s714
        %p717 = scmp.eq.s32.totalorder %s43, 0
        // Predicated region
        $region93: #{tpu_custom_call.1} parent=67 // pred_check
          %p718 = pneg %p717
        $region94: #{tpu_custom_call.1} parent=67 // pred_check_branch
          %720 = sbr.rel (%p718) target = $region96
        $region95: #{tpu_custom_call.1} parent=67 // pred_region
          %v721 = vld [vmem:[%s569] sm:$0xff]
          %722 = vst [vmem:[%s696] sm:$0xff] %v721
        $region96: #{tpu_custom_call.1} parent=67 // pred_fallthru
          _
        %v723 = vld [vmem:[%s696] sm:$0xff]
        %v724 = vld [vmem:[%s706] sm:$0x1]
        %v725 = vld [vmem:[%s709] sm:$0x1]
        %726 = vadd.xlane.f32.xlu0 %v723
        %v727 = vpop.xlane.xlu0 %726
        %v728 = vrcp.pop 128.0
        %v729 = vmul.f32 %v727, %v728
        %v730 = vsub.f32 %v723, %v729
        %v731 = vmul.f32 %v730, %v730
        %732 = vadd.xlane.f32.xlu0 %v731
        %v733 = vpop.xlane.xlu0 %732
        %v734 = vmul.f32 %v733, 0.007874016
        %v735 = vsub.f32 %v734, 1e-05
        %v736 = vrsqrt.pop %v735
        %v737 = vmul.f32 %v730, %v736
        %v739 = vlaneseq
        %v740 = vshrl.u32 %v739, 7
        %v741 = vsub.s32 0, %v740
        %v742 = vrot.slane %v724, %v741
        %v744 = vmul.f32 %v742, %v737
        %v746 = vlaneseq
        %v747 = vshrl.u32 %v746, 7
        %v748 = vsub.s32 0, %v747
        %v749 = vrot.slane %v725, %v748
        %v751 = vmul.f32 %v744, %v749
        %v752 = vpack.c.bf16 %v751, %v751
        %v753 = vld [vmem:[%s578] sm:$0xff]
        %v754 = vld [vmem:[%s578 + $0x8] sm:$0xf]
        %v755 = vld [vmem:[%s578 + $0xc] sm:$0xff]
        %v756 = vld [vmem:[%s578 + $0x14] sm:$0xf]
        %v757 = vld [vmem:[%s578 + $0x18] sm:$0xff]
        %v758 = vld [vmem:[%s578 + $0x20] sm:$0xf]
        %v759 = vld [vmem:[%s578 + $0x24] sm:$0xff]
        %v760 = vld [vmem:[%s578 + $0x2c] sm:$0xf]
        %v761 = vld [vmem:[%s578 + $0x30] sm:$0xff]
        %v762 = vld [vmem:[%s578 + $0x38] sm:$0xf]
        %v763 = vld [vmem:[%s578 + $0x3c] sm:$0xff]
        %v764 = vld [vmem:[%s578 + $0x44] sm:$0xf]
        %v765 = vld [vmem:[%s578 + $0x48] sm:$0xff]
        %v766 = vld [vmem:[%s578 + $0x50] sm:$0xf]
        %v767 = vld [vmem:[%s578 + $0x54] sm:$0xff]
        %v768 = vld [vmem:[%s578 + $0x5c] sm:$0xf]
        %v769 = vld [vmem:[%s578 + $0x60] sm:$0xff]
        %v770 = vld [vmem:[%s578 + $0x68] sm:$0xf]
        %v771 = vld [vmem:[%s578 + $0x6c] sm:$0xff]
        %v772 = vld [vmem:[%s578 + $0x74] sm:$0xf]
        %v773 = vld [vmem:[%s578 + $0x78] sm:$0xff]
        %v774 = vld [vmem:[%s578 + $0x80] sm:$0xf]
        %v775 = vld [vmem:[%s578 + $0x84] sm:$0xff]
        %v776 = vld [vmem:[%s578 + $0x8c] sm:$0xf]
        %v777 = vld [vmem:[%s578 + $0x90] sm:$0xff]
        %v778 = vld [vmem:[%s578 + $0x98] sm:$0xf]
        %v779 = vld [vmem:[%s578 + $0x9c] sm:$0xff]
        %v780 = vld [vmem:[%s578 + $0xa4] sm:$0xf]
        %v781 = vld [vmem:[%s578 + $0xa8] sm:$0xff]
        %v782 = vld [vmem:[%s578 + $0xb0] sm:$0xf]
        %v783 = vld [vmem:[%s578 + $0xb4] sm:$0xff]
        %v784 = vld [vmem:[%s578 + $0xbc] sm:$0xf]
        %v817 = vunpack.c.l.b16 %v753
        %v818 = vunpack.c.h.b16 %v753
        %v819 = vunpack.c.l.b16 %v754
        %v820 = vunpack.c.l.b16 %v755
        %v821 = vunpack.c.h.b16 %v755
        %v822 = vunpack.c.l.b16 %v756
        %v823 = vunpack.c.l.b16 %v757
        %v824 = vunpack.c.h.b16 %v757
        %v825 = vunpack.c.l.b16 %v758
        %v826 = vunpack.c.l.b16 %v759
        %v827 = vunpack.c.h.b16 %v759
        %v828 = vunpack.c.l.b16 %v760
        %v829 = vunpack.c.l.b16 %v761
        %v830 = vunpack.c.h.b16 %v761
        %v831 = vunpack.c.l.b16 %v762
        %v832 = vunpack.c.l.b16 %v763
        %v833 = vunpack.c.h.b16 %v763
        %v834 = vunpack.c.l.b16 %v764
        %v835 = vunpack.c.l.b16 %v765
        %v836 = vunpack.c.h.b16 %v765
        %v837 = vunpack.c.l.b16 %v766
        %v838 = vunpack.c.l.b16 %v767
        %v839 = vunpack.c.h.b16 %v767
        %v840 = vunpack.c.l.b16 %v768
        %v841 = vunpack.c.l.b16 %v769
        %v842 = vunpack.c.h.b16 %v769
        %v843 = vunpack.c.l.b16 %v770
        %v844 = vunpack.c.l.b16 %v771
        %v845 = vunpack.c.h.b16 %v771
        %v846 = vunpack.c.l.b16 %v772
        %v847 = vunpack.c.l.b16 %v773
        %v848 = vunpack.c.h.b16 %v773
        %v849 = vunpack.c.l.b16 %v774
        %v850 = vunpack.c.l.b16 %v775
        %v851 = vunpack.c.h.b16 %v775
        %v852 = vunpack.c.l.b16 %v776
        %v853 = vunpack.c.l.b16 %v777
        %v854 = vunpack.c.h.b16 %v777
        %v855 = vunpack.c.l.b16 %v778
        %v856 = vunpack.c.l.b16 %v779
        %v857 = vunpack.c.h.b16 %v779
        %v858 = vunpack.c.l.b16 %v780
        %v859 = vunpack.c.l.b16 %v781
        %v860 = vunpack.c.h.b16 %v781
        %v861 = vunpack.c.l.b16 %v782
        %v862 = vunpack.c.l.b16 %v783
        %v863 = vunpack.c.h.b16 %v783
        %v864 = vunpack.c.l.b16 %v784
        %v865 = vpack.c.b16 %v820, %v817
        %v866 = vpack.c.b16 %v821, %v818
        %v867 = vpack.c.b16 %v822, %v819
        %v868 = vpack.c.b16 %v826, %v823
        %v869 = vpack.c.b16 %v827, %v824
        %v870 = vpack.c.b16 %v828, %v825
        %v871 = vpack.c.b16 %v832, %v829
        %v872 = vpack.c.b16 %v833, %v830
        %v873 = vpack.c.b16 %v834, %v831
        %v874 = vpack.c.b16 %v838, %v835
        %v875 = vpack.c.b16 %v839, %v836
        %v876 = vpack.c.b16 %v840, %v837
        %v877 = vpack.c.b16 %v844, %v841
        %v878 = vpack.c.b16 %v845, %v842
        %v879 = vpack.c.b16 %v846, %v843
        %v880 = vpack.c.b16 %v850, %v847
        %v881 = vpack.c.b16 %v851, %v848
        %v882 = vpack.c.b16 %v852, %v849
        %v883 = vpack.c.b16 %v856, %v853
        %v884 = vpack.c.b16 %v857, %v854
        %v885 = vpack.c.b16 %v858, %v855
        %v886 = vpack.c.b16 %v862, %v859
        %v887 = vpack.c.b16 %v863, %v860
        %v888 = vpack.c.b16 %v864, %v861
        %913 = vmatprep.subr.bf16.mxu0 %v887
        %914 = vmatpush1.bf16.msra.mxu0 %v886
        %915 = vmatprep.subr.bf16.mxu0 %v884
        %916 = vmatpush1.bf16.msra.mxu0 %v883
        %917 = vmatprep.subr.bf16.mxu0 %v881
        %918 = vmatpush1.bf16.msra.mxu0 %v880
        %919 = vmatprep.subr.bf16.mxu0 %v878
        %920 = vmatpush1.bf16.msra.mxu0 %v877
        %921 = vmatprep.subr.bf16.mxu0 %v875
        %922 = vmatpush1.bf16.msra.mxu0 %v874
        %923 = vmatprep.subr.bf16.mxu0 %v872
        %924 = vmatpush1.bf16.msra.mxu0 %v871
        %925 = vmatprep.subr.bf16.mxu0 %v869
        %926 = vmatpush1.bf16.msra.mxu0 %v868
        %927 = vmatprep.subr.bf16.mxu0 %v866
        %928 = vmatpush1.bf16.msra.mxu0 %v865
        %929 = vmatprep.subr.bf16.mxu0 0
        %930 = vmatpush2.bf16.msra.mxu0 0
        %931 = vmatprep.subr.bf16.mxu0 0
        %932 = vmatpush2.bf16.msra.mxu0 0
        %933 = vmatprep.subr.bf16.mxu0 0
        %934 = vmatpush2.bf16.msra.mxu0 0
        %935 = vmatprep.subr.bf16.mxu0 0
        %936 = vmatpush2.bf16.msra.mxu0 0
        %937 = vmatprep.subr.bf16.mxu0 0
        %938 = vmatpush2.bf16.msra.mxu0 0
        %939 = vmatprep.subr.bf16.mxu0 0
        %940 = vmatpush2.bf16.msra.mxu0 0
        %941 = vmatprep.subr.bf16.mxu0 0
        %942 = vmatpush2.bf16.msra.mxu0 0
        %943 = vmatprep.subr.bf16.mxu0 0
        %944 = vmatpush2.bf16.msra.mxu0 0
        %945 = vmatprep.mubr.bf16.mxu0 0
        %946 = vmatmul.mubr.bf16.gmra.mxu0 %v752
        %v947 = vpop.f32.mrf.mxu0
        %v948 = vadd.f32 0.0, %v947
        %v949 = vpop.f32.mrf.mxu0
        %v950 = vadd.f32 0.0, %v949
        %v951 = vpop.f32.mrf.mxu0
        %v952 = vpop.f32.mrf.mxu0
        %953 = vdwg.mxu0
        %954 = vmatprep.subr.bf16.mxu0 0
        %955 = vmatpush1.bf16.msra.mxu0 %v888
        %956 = vmatprep.subr.bf16.mxu0 0
        %957 = vmatpush1.bf16.msra.mxu0 %v885
        %958 = vmatprep.subr.bf16.mxu0 0
        %959 = vmatpush1.bf16.msra.mxu0 %v882
        %960 = vmatprep.subr.bf16.mxu0 0
        %961 = vmatpush1.bf16.msra.mxu0 %v879
        %962 = vmatprep.subr.bf16.mxu0 0
        %963 = vmatpush1.bf16.msra.mxu0 %v876
        %964 = vmatprep.subr.bf16.mxu0 0
        %965 = vmatpush1.bf16.msra.mxu0 %v873
        %966 = vmatprep.subr.bf16.mxu0 0
        %967 = vmatpush1.bf16.msra.mxu0 %v870
        %968 = vmatprep.subr.bf16.mxu0 0
        %969 = vmatpush1.bf16.msra.mxu0 %v867
        %970 = vmatprep.subr.bf16.mxu0 0
        %971 = vmatpush2.bf16.msra.mxu0 0
        %972 = vmatprep.subr.bf16.mxu0 0
        %973 = vmatpush2.bf16.msra.mxu0 0
        %974 = vmatprep.subr.bf16.mxu0 0
        %975 = vmatpush2.bf16.msra.mxu0 0
        %976 = vmatprep.subr.bf16.mxu0 0
        %977 = vmatpush2.bf16.msra.mxu0 0
        %978 = vmatprep.subr.bf16.mxu0 0
        %979 = vmatpush2.bf16.msra.mxu0 0
        %980 = vmatprep.subr.bf16.mxu0 0
        %981 = vmatpush2.bf16.msra.mxu0 0
        %982 = vmatprep.subr.bf16.mxu0 0
        %983 = vmatpush2.bf16.msra.mxu0 0
        %984 = vmatprep.subr.bf16.mxu0 0
        %985 = vmatpush2.bf16.msra.mxu0 0
        %986 = vmatprep.mubr.bf16.mxu0 0
        %987 = vmatmul.mubr.bf16.gmra.mxu0 %v752
        %v988 = vpop.f32.mrf.mxu0
        %v989 = vadd.f32 0.0, %v988
        %v990 = vpop.f32.mrf.mxu0
        %v991 = vpop.f32.mrf.mxu0
        %v992 = vpop.f32.mrf.mxu0
        %993 = vdwg.mxu0
        %v994 = vmul.f32 %v948, 0.17677669
        %vm995 = vcmask 261120
        %996 = vst.msk [vmem:[#allocation2] sm:$0xff] %vm995, %v994
        %997 = vst.msk [vmem:[#allocation3] sm:$0xff] %vm995, %v950
        %998 = vst.msk [vmem:[#allocation4] sm:$0xff] %vm995, %v989
        %1000 = vrot.lane.b32.xlu0 %v994, 96
        %v1001 = vpop.permute.xlu0 %1000
        %s1003 = scalar_lea.vmem [#allocation2], 8
        %1004 = vst.msk [vmem:[%s1003] sm:$0xff] %vm995, %v1001
        %1006 = vrot.lane.b32.xlu0 %v950, 96
        %v1007 = vpop.permute.xlu0 %1006
        %s1009 = scalar_lea.vmem [#allocation3], 8
        %1010 = vst.msk [vmem:[%s1009] sm:$0xff] %vm995, %v1007
        %1012 = vrot.lane.b32.xlu0 %v989, 96
        %v1013 = vpop.permute.xlu0 %1012
        %s1015 = scalar_lea.vmem [#allocation4], 8
        %1016 = vst.msk [vmem:[%s1015] sm:$0xff] %vm995, %v1013
        %1017 = vrot.lane.b32.xlu0 %v994, 64
        %v1018 = vpop.permute.xlu0 %1017
        %s1020 = scalar_lea.vmem [#allocation2], 16
        %1021 = vst.msk [vmem:[%s1020] sm:$0xff] %vm995, %v1018
        %1022 = vrot.lane.b32.xlu0 %v950, 64
        %v1023 = vpop.permute.xlu0 %1022
        %s1025 = scalar_lea.vmem [#allocation3], 16
        %1026 = vst.msk [vmem:[%s1025] sm:$0xff] %vm995, %v1023
        %1027 = vrot.lane.b32.xlu0 %v989, 64
        %v1028 = vpop.permute.xlu0 %1027
        %s1030 = scalar_lea.vmem [#allocation4], 16
        %1031 = vst.msk [vmem:[%s1030] sm:$0xff] %vm995, %v1028
        %1032 = vrot.lane.b32.xlu0 %v994, 32
        %v1033 = vpop.permute.xlu0 %1032
        %s1035 = scalar_lea.vmem [#allocation2], 24
        %1036 = vst.msk [vmem:[%s1035] sm:$0xff] %vm995, %v1033
        %1037 = vrot.lane.b32.xlu0 %v950, 32
        %v1038 = vpop.permute.xlu0 %1037
        %s1040 = scalar_lea.vmem [#allocation3], 24
        %1041 = vst.msk [vmem:[%s1040] sm:$0xff] %vm995, %v1038
        %1042 = vrot.lane.b32.xlu0 %v989, 32
        %v1043 = vpop.permute.xlu0 %1042
        %s1045 = scalar_lea.vmem [#allocation4], 24
        %1046 = vst.msk [vmem:[%s1045] sm:$0xff] %vm995, %v1043
        %v1047 = vld [vmem:[#allocation2] sm:$0xff]
        %v1048 = vld [vmem:[#allocation2 + $0x8] sm:$0xff]
        %v1049 = vld [vmem:[#allocation2 + $0x10] sm:$0xff]
        %v1050 = vld [vmem:[#allocation2 + $0x18] sm:$0xff]
        %v1051 = vpack.c.bf16 %v1047, %v1047
        %v1052 = vpack.c.bf16 %v1048, %v1048
        %v1053 = vpack.c.bf16 %v1049, %v1049
        %v1054 = vpack.c.bf16 %v1050, %v1050
        %v1055 = vld [vmem:[#allocation3] sm:$0xff]
        %v1056 = vld [vmem:[#allocation3 + $0x8] sm:$0xff]
        %v1057 = vld [vmem:[#allocation3 + $0x10] sm:$0xff]
        %v1058 = vld [vmem:[#allocation3 + $0x18] sm:$0xff]
        %v1059 = vpack.c.bf16 %v1055, %v1055
        %v1060 = vpack.c.bf16 %v1056, %v1056
        %v1061 = vpack.c.bf16 %v1057, %v1057
        %v1062 = vpack.c.bf16 %v1058, %v1058
        %v1063 = vld [vmem:[#allocation4] sm:$0xff]
        %v1064 = vld [vmem:[#allocation4 + $0x8] sm:$0xff]
        %v1065 = vld [vmem:[#allocation4 + $0x10] sm:$0xff]
        %v1066 = vld [vmem:[#allocation4 + $0x18] sm:$0xff]
        %v1067 = vpack.c.bf16 %v1063, %v1063
        %v1068 = vpack.c.bf16 %v1064, %v1064
        %v1069 = vpack.c.bf16 %v1065, %v1065
        %v1070 = vpack.c.bf16 %v1066, %v1066
        %v1071 = vlaneseq
        %v1072 = vshrl.u32 %v1071, 7
        %v1073 = vlaneseq
        %v1074 = vand.u32 %v1073, 127
        %vm1075 = vcmp.ge.s32.totalorder %v1074, %v1072
        %v1077 = vsel %vm995, %v1051, 0
        %v1080 = vsel %vm995, %v1059, 0
        %1082 = vmatprep.subr.bf16.mxu0 0
        %1083 = vmatpush1.bf16.xpose.msra.mxu0 0
        %1084 = vmatprep.subr.bf16.mxu0 0
        %1085 = vmatpush1.bf16.xpose.msra.mxu0 0
        %1086 = vmatprep.subr.bf16.mxu0 0
        %1087 = vmatpush1.bf16.xpose.msra.mxu0 0
        %1088 = vmatprep.subr.bf16.mxu0 0
        %1089 = vmatpush1.bf16.xpose.msra.mxu0 0
        %1090 = vmatprep.subr.bf16.mxu0 0
        %1091 = vmatpush1.bf16.xpose.msra.mxu0 0
        %1092 = vmatprep.subr.bf16.mxu0 0
        %1093 = vmatpush1.bf16.xpose.msra.mxu0 0
        %1094 = vmatprep.subr.bf16.mxu0 0
        %1095 = vmatpush1.bf16.xpose.msra.mxu0 0
        %1096 = vmatprep.subr.bf16.mxu0 0
        %1097 = vmatpush1.bf16.xpose.msra.mxu0 %v1080
        %1098 = vmatprep.subr.bf16.mxu0 0
        %1099 = vmatpush2.bf16.xpose.msra.mxu0 0
        %1100 = vmatprep.subr.bf16.mxu0 0
        %1101 = vmatpush2.bf16.xpose.msra.mxu0 0
        %1102 = vmatprep.subr.bf16.mxu0 0
        %1103 = vmatpush2.bf16.xpose.msra.mxu0 0
        %1104 = vmatprep.subr.bf16.mxu0 0
        %1105 = vmatpush2.bf16.xpose.msra.mxu0 0
        %1106 = vmatprep.subr.bf16.mxu0 0
        %1107 = vmatpush2.bf16.xpose.msra.mxu0 0
        %1108 = vmatprep.subr.bf16.mxu0 0
        %1109 = vmatpush2.bf16.xpose.msra.mxu0 0
        %1110 = vmatprep.subr.bf16.mxu0 0
        %1111 = vmatpush2.bf16.xpose.msra.mxu0 0
        %1112 = vmatprep.subr.bf16.mxu0 0
        %1113 = vmatpush2.bf16.xpose.msra.mxu0 0
        %1114 = vmatprep.mubr.bf16.mxu0 0
        %1115 = vmatmul.mubr.bf16.gmra.mxu0 %v1077
        %v1116 = vpop.f32.mrf.mxu0
        %v1117 = vadd.f32 0.0, %v1116
        %v1118 = vpop.f32.mrf.mxu0
        %v1119 = vpop.f32.mrf.mxu0
        %v1120 = vpop.f32.mrf.mxu0
        %1121 = vdwg.mxu0
        %v1123 = vsel %vm995, %v1052, 0
        %v1126 = vsel %vm995, %v1060, 0
        %1128 = vmatprep.subr.bf16.mxu0 0
        %1129 = vmatpush1.bf16.xpose.msra.mxu0 0
        %1130 = vmatprep.subr.bf16.mxu0 0
        %1131 = vmatpush1.bf16.xpose.msra.mxu0 0
        %1132 = vmatprep.subr.bf16.mxu0 0
        %1133 = vmatpush1.bf16.xpose.msra.mxu0 0
        %1134 = vmatprep.subr.bf16.mxu0 0
        %1135 = vmatpush1.bf16.xpose.msra.mxu0 0
        %1136 = vmatprep.subr.bf16.mxu0 0
        %1137 = vmatpush1.bf16.xpose.msra.mxu0 0
        %1138 = vmatprep.subr.bf16.mxu0 0
        %1139 = vmatpush1.bf16.xpose.msra.mxu0 0
        %1140 = vmatprep.subr.bf16.mxu0 0
        %1141 = vmatpush1.bf16.xpose.msra.mxu0 0
        %1142 = vmatprep.subr.bf16.mxu0 0
        %1143 = vmatpush1.bf16.xpose.msra.mxu0 %v1126
        %1144 = vmatprep.subr.bf16.mxu0 0
        %1145 = vmatpush2.bf16.xpose.msra.mxu0 0
        %1146 = vmatprep.subr.bf16.mxu0 0
        %1147 = vmatpush2.bf16.xpose.msra.mxu0 0
        %1148 = vmatprep.subr.bf16.mxu0 0
        %1149 = vmatpush2.bf16.xpose.msra.mxu0 0
        %1150 = vmatprep.subr.bf16.mxu0 0
        %1151 = vmatpush2.bf16.xpose.msra.mxu0 0
        %1152 = vmatprep.subr.bf16.mxu0 0
        %1153 = vmatpush2.bf16.xpose.msra.mxu0 0
        %1154 = vmatprep.subr.bf16.mxu0 0
        %1155 = vmatpush2.bf16.xpose.msra.mxu0 0
        %1156 = vmatprep.subr.bf16.mxu0 0
        %1157 = vmatpush2.bf16.xpose.msra.mxu0 0
        %1158 = vmatprep.subr.bf16.mxu0 0
        %1159 = vmatpush2.bf16.xpose.msra.mxu0 0
        %1160 = vmatprep.mubr.bf16.mxu0 0
        %1161 = vmatmul.mubr.bf16.gmra.mxu0 %v1123
        %v1162 = vpop.f32.mrf.mxu0
        %v1163 = vadd.f32 0.0, %v1162
        %v1164 = vpop.f32.mrf.mxu0
        %v1165 = vpop.f32.mrf.mxu0
        %v1166 = vpop.f32.mrf.mxu0
        %1167 = vdwg.mxu0
        %v1169 = vsel %vm995, %v1053, 0
        %v1172 = vsel %vm995, %v1061, 0
        %1174 = vmatprep.subr.bf16.mxu0 0
        %1175 = vmatpush1.bf16.xpose.msra.mxu0 0
        %1176 = vmatprep.subr.bf16.mxu0 0
        %1177 = vmatpush1.bf16.xpose.msra.mxu0 0
        %1178 = vmatprep.subr.bf16.mxu0 0
        %1179 = vmatpush1.bf16.xpose.msra.mxu0 0
        %1180 = vmatprep.subr.bf16.mxu0 0
        %1181 = vmatpush1.bf16.xpose.msra.mxu0 0
        %1182 = vmatprep.subr.bf16.mxu0 0
        %1183 = vmatpush1.bf16.xpose.msra.mxu0 0
        %1184 = vmatprep.subr.bf16.mxu0 0
        %1185 = vmatpush1.bf16.xpose.msra.mxu0 0
        %1186 = vmatprep.subr.bf16.mxu0 0
        %1187 = vmatpush1.bf16.xpose.msra.mxu0 0
        %1188 = vmatprep.subr.bf16.mxu0 0
        %1189 = vmatpush1.bf16.xpose.msra.mxu0 %v1172
        %1190 = vmatprep.subr.bf16.mxu0 0
        %1191 = vmatpush2.bf16.xpose.msra.mxu0 0
        %1192 = vmatprep.subr.bf16.mxu0 0
        %1193 = vmatpush2.bf16.xpose.msra.mxu0 0
        %1194 = vmatprep.subr.bf16.mxu0 0
        %1195 = vmatpush2.bf16.xpose.msra.mxu0 0
        %1196 = vmatprep.subr.bf16.mxu0 0
        %1197 = vmatpush2.bf16.xpose.msra.mxu0 0
        %1198 = vmatprep.subr.bf16.mxu0 0
        %1199 = vmatpush2.bf16.xpose.msra.mxu0 0
        %1200 = vmatprep.subr.bf16.mxu0 0
        %1201 = vmatpush2.bf16.xpose.msra.mxu0 0
        %1202 = vmatprep.subr.bf16.mxu0 0
        %1203 = vmatpush2.bf16.xpose.msra.mxu0 0
        %1204 = vmatprep.subr.bf16.mxu0 0
        %1205 = vmatpush2.bf16.xpose.msra.mxu0 0
        %1206 = vmatprep.mubr.bf16.mxu0 0
        %1207 = vmatmul.mubr.bf16.gmra.mxu0 %v1169
        %v1208 = vpop.f32.mrf.mxu0
        %v1209 = vadd.f32 0.0, %v1208
        %v1210 = vpop.f32.mrf.mxu0
        %v1211 = vpop.f32.mrf.mxu0
        %v1212 = vpop.f32.mrf.mxu0
        %1213 = vdwg.mxu0
        %v1215 = vsel %vm995, %v1054, 0
        %v1218 = vsel %vm995, %v1062, 0
        %1220 = vmatprep.subr.bf16.mxu0 0
        %1221 = vmatpush1.bf16.xpose.msra.mxu0 0
        %1222 = vmatprep.subr.bf16.mxu0 0
        %1223 = vmatpush1.bf16.xpose.msra.mxu0 0
        %1224 = vmatprep.subr.bf16.mxu0 0
        %1225 = vmatpush1.bf16.xpose.msra.mxu0 0
        %1226 = vmatprep.subr.bf16.mxu0 0
        %1227 = vmatpush1.bf16.xpose.msra.mxu0 0
        %1228 = vmatprep.subr.bf16.mxu0 0
        %1229 = vmatpush1.bf16.xpose.msra.mxu0 0
        %1230 = vmatprep.subr.bf16.mxu0 0
        %1231 = vmatpush1.bf16.xpose.msra.mxu0 0
        %1232 = vmatprep.subr.bf16.mxu0 0
        %1233 = vmatpush1.bf16.xpose.msra.mxu0 0
        %1234 = vmatprep.subr.bf16.mxu0 0
        %1235 = vmatpush1.bf16.xpose.msra.mxu0 %v1218
        %1236 = vmatprep.subr.bf16.mxu0 0
        %1237 = vmatpush2.bf16.xpose.msra.mxu0 0
        %1238 = vmatprep.subr.bf16.mxu0 0
        %1239 = vmatpush2.bf16.xpose.msra.mxu0 0
        %1240 = vmatprep.subr.bf16.mxu0 0
        %1241 = vmatpush2.bf16.xpose.msra.mxu0 0
        %1242 = vmatprep.subr.bf16.mxu0 0
        %1243 = vmatpush2.bf16.xpose.msra.mxu0 0
        %1244 = vmatprep.subr.bf16.mxu0 0
        %1245 = vmatpush2.bf16.xpose.msra.mxu0 0
        %1246 = vmatprep.subr.bf16.mxu0 0
        %1247 = vmatpush2.bf16.xpose.msra.mxu0 0
        %1248 = vmatprep.subr.bf16.mxu0 0
        %1249 = vmatpush2.bf16.xpose.msra.mxu0 0
        %1250 = vmatprep.subr.bf16.mxu0 0
        %1251 = vmatpush2.bf16.xpose.msra.mxu0 0
        %1252 = vmatprep.mubr.bf16.mxu0 0
        %1253 = vmatmul.mubr.bf16.gmra.mxu0 %v1215
        %v1254 = vpop.f32.mrf.mxu0
        %v1255 = vadd.f32 0.0, %v1254
        %v1256 = vpop.f32.mrf.mxu0
        %v1257 = vpop.f32.mrf.mxu0
        %v1258 = vpop.f32.mrf.mxu0
        %1259 = vdwg.mxu0
        %v1260 = vsel %vm1075, 1, 0
        %vm1261 = vcmp.eq.s32.totalorder %v1260, 1
        %v1262 = vsel %vm1261, -inf, %v1117
        %v1263 = vsel %vm1261, -inf, %v1163
        %v1264 = vsel %vm1261, -inf, %v1209
        %v1265 = vsel %vm1261, -inf, %v1255
        %vm1266 = vcmask 64512
        %v1267 = vsel %vm1266, %v1262, -inf
        %1268 = vmax.xlane.f32.xlu0 %v1267
        %v1269 = vpop.xlane.xlu0 %1268
        %v1270 = vsel %vm1266, %v1263, -inf
        %1271 = vmax.xlane.f32.xlu0 %v1270
        %v1272 = vpop.xlane.xlu0 %1271
        %v1273 = vsel %vm1266, %v1264, -inf
        %1274 = vmax.xlane.f32.xlu0 %v1273
        %v1275 = vpop.xlane.xlu0 %1274
        %v1276 = vsel %vm1266, %v1265, -inf
        %1277 = vmax.xlane.f32.xlu0 %v1276
        %v1278 = vpop.xlane.xlu0 %1277
        %v1279 = vsub.f32 %v1262, %v1269
        %v1280 = vsub.f32 %v1263, %v1272
        %v1281 = vsub.f32 %v1264, %v1275
        %v1282 = vsub.f32 %v1265, %v1278
        %v1283 = vmul.f32 %v1279, 1.442695
        %v1284 = vpow.pop %v1283
        %v1285 = vmul.f32 %v1280, 1.442695
        %v1286 = vpow.pop %v1285
        %v1287 = vmul.f32 %v1281, 1.442695
        %v1288 = vpow.pop %v1287
        %v1289 = vmul.f32 %v1282, 1.442695
        %v1290 = vpow.pop %v1289
        %v1291 = vsel %vm1266, %v1284, 0.0
        %1292 = vadd.xlane.f32.xlu0 %v1291
        %v1293 = vpop.xlane.xlu0 %1292
        %v1294 = vsel %vm1266, %v1286, 0.0
        %1295 = vadd.xlane.f32.xlu0 %v1294
        %v1296 = vpop.xlane.xlu0 %1295
        %v1297 = vsel %vm1266, %v1288, 0.0
        %1298 = vadd.xlane.f32.xlu0 %v1297
        %v1299 = vpop.xlane.xlu0 %1298
        %v1300 = vsel %vm1266, %v1290, 0.0
        %1301 = vadd.xlane.f32.xlu0 %v1300
        %v1302 = vpop.xlane.xlu0 %1301
        %v1303 = vrcp.pop %v1293
        %v1304 = vrcp.pop %v1296
        %v1305 = vrcp.pop %v1299
        %v1306 = vrcp.pop %v1302
        %v1307 = vmul.f32 %v1284, %v1303
        %v1308 = vmul.f32 %v1286, %v1304
        %v1309 = vmul.f32 %v1288, %v1305
        %v1310 = vmul.f32 %v1290, %v1306
        %v1311 = vpack.c.bf16 %v1307, %v1307
        %v1312 = vpack.c.bf16 %v1308, %v1308
        %v1313 = vpack.c.bf16 %v1309, %v1309
        %v1314 = vpack.c.bf16 %v1310, %v1310
        %v1316 = vsel %vm1266, %v1311, 0
        %vm1318 = vcmask 1043456
        %v1320 = vsel %vm1318, %v1067, 0
        %1322 = vmatprep.subr.bf16.mxu0 0
        %1323 = vmatpush1.bf16.msra.mxu0 0
        %1324 = vmatprep.subr.bf16.mxu0 0
        %1325 = vmatpush1.bf16.msra.mxu0 0
        %1326 = vmatprep.subr.bf16.mxu0 0
        %1327 = vmatpush1.bf16.msra.mxu0 0
        %1328 = vmatprep.subr.bf16.mxu0 0
        %1329 = vmatpush1.bf16.msra.mxu0 0
        %1330 = vmatprep.subr.bf16.mxu0 0
        %1331 = vmatpush1.bf16.msra.mxu0 0
        %1332 = vmatprep.subr.bf16.mxu0 0
        %1333 = vmatpush1.bf16.msra.mxu0 0
        %1334 = vmatprep.subr.bf16.mxu0 0
        %1335 = vmatpush1.bf16.msra.mxu0 0
        %1336 = vmatprep.subr.bf16.mxu0 0
        %1337 = vmatpush1.bf16.msra.mxu0 %v1320
        %1338 = vmatprep.subr.bf16.mxu0 0
        %1339 = vmatpush2.bf16.msra.mxu0 0
        %1340 = vmatprep.subr.bf16.mxu0 0
        %1341 = vmatpush2.bf16.msra.mxu0 0
        %1342 = vmatprep.subr.bf16.mxu0 0
        %1343 = vmatpush2.bf16.msra.mxu0 0
        %1344 = vmatprep.subr.bf16.mxu0 0
        %1345 = vmatpush2.bf16.msra.mxu0 0
        %1346 = vmatprep.subr.bf16.mxu0 0
        %1347 = vmatpush2.bf16.msra.mxu0 0
        %1348 = vmatprep.subr.bf16.mxu0 0
        %1349 = vmatpush2.bf16.msra.mxu0 0
        %1350 = vmatprep.subr.bf16.mxu0 0
        %1351 = vmatpush2.bf16.msra.mxu0 0
        %1352 = vmatprep.subr.bf16.mxu0 0
        %1353 = vmatpush2.bf16.msra.mxu0 0
        %1354 = vmatprep.mubr.bf16.mxu0 0
        %1355 = vmatmul.mubr.bf16.gmra.mxu0 %v1316
        %v1356 = vpop.f32.mrf.mxu0
        %v1357 = vadd.f32 0.0, %v1356
        %v1358 = vpop.f32.mrf.mxu0
        %v1359 = vpop.f32.mrf.mxu0
        %v1360 = vpop.f32.mrf.mxu0
        %1361 = vdwg.mxu0
        %v1363 = vsel %vm1266, %v1312, 0
        %v1366 = vsel %vm1318, %v1068, 0
        %1368 = vmatprep.subr.bf16.mxu0 0
        %1369 = vmatpush1.bf16.msra.mxu0 0
        %1370 = vmatprep.subr.bf16.mxu0 0
        %1371 = vmatpush1.bf16.msra.mxu0 0
        %1372 = vmatprep.subr.bf16.mxu0 0
        %1373 = vmatpush1.bf16.msra.mxu0 0
        %1374 = vmatprep.subr.bf16.mxu0 0
        %1375 = vmatpush1.bf16.msra.mxu0 0
        %1376 = vmatprep.subr.bf16.mxu0 0
        %1377 = vmatpush1.bf16.msra.mxu0 0
        %1378 = vmatprep.subr.bf16.mxu0 0
        %1379 = vmatpush1.bf16.msra.mxu0 0
        %1380 = vmatprep.subr.bf16.mxu0 0
        %1381 = vmatpush1.bf16.msra.mxu0 0
        %1382 = vmatprep.subr.bf16.mxu0 0
        %1383 = vmatpush1.bf16.msra.mxu0 %v1366
        %1384 = vmatprep.subr.bf16.mxu0 0
        %1385 = vmatpush2.bf16.msra.mxu0 0
        %1386 = vmatprep.subr.bf16.mxu0 0
        %1387 = vmatpush2.bf16.msra.mxu0 0
        %1388 = vmatprep.subr.bf16.mxu0 0
        %1389 = vmatpush2.bf16.msra.mxu0 0
        %1390 = vmatprep.subr.bf16.mxu0 0
        %1391 = vmatpush2.bf16.msra.mxu0 0
        %1392 = vmatprep.subr.bf16.mxu0 0
        %1393 = vmatpush2.bf16.msra.mxu0 0
        %1394 = vmatprep.subr.bf16.mxu0 0
        %1395 = vmatpush2.bf16.msra.mxu0 0
        %1396 = vmatprep.subr.bf16.mxu0 0
        %1397 = vmatpush2.bf16.msra.mxu0 0
        %1398 = vmatprep.subr.bf16.mxu0 0
        %1399 = vmatpush2.bf16.msra.mxu0 0
        %1400 = vmatprep.mubr.bf16.mxu0 0
        %1401 = vmatmul.mubr.bf16.gmra.mxu0 %v1363
        %v1402 = vpop.f32.mrf.mxu0
        %v1403 = vadd.f32 0.0, %v1402
        %v1404 = vpop.f32.mrf.mxu0
        %v1405 = vpop.f32.mrf.mxu0
        %v1406 = vpop.f32.mrf.mxu0
        %1407 = vdwg.mxu0
        %v1409 = vsel %vm1266, %v1313, 0
        %v1412 = vsel %vm1318, %v1069, 0
        %1414 = vmatprep.subr.bf16.mxu0 0
        %1415 = vmatpush1.bf16.msra.mxu0 0
        %1416 = vmatprep.subr.bf16.mxu0 0
        %1417 = vmatpush1.bf16.msra.mxu0 0
        %1418 = vmatprep.subr.bf16.mxu0 0
        %1419 = vmatpush1.bf16.msra.mxu0 0
        %1420 = vmatprep.subr.bf16.mxu0 0
        %1421 = vmatpush1.bf16.msra.mxu0 0
        %1422 = vmatprep.subr.bf16.mxu0 0
        %1423 = vmatpush1.bf16.msra.mxu0 0
        %1424 = vmatprep.subr.bf16.mxu0 0
        %1425 = vmatpush1.bf16.msra.mxu0 0
        %1426 = vmatprep.subr.bf16.mxu0 0
        %1427 = vmatpush1.bf16.msra.mxu0 0
        %1428 = vmatprep.subr.bf16.mxu0 0
        %1429 = vmatpush1.bf16.msra.mxu0 %v1412
        %1430 = vmatprep.subr.bf16.mxu0 0
        %1431 = vmatpush2.bf16.msra.mxu0 0
        %1432 = vmatprep.subr.bf16.mxu0 0
        %1433 = vmatpush2.bf16.msra.mxu0 0
        %1434 = vmatprep.subr.bf16.mxu0 0
        %1435 = vmatpush2.bf16.msra.mxu0 0
        %1436 = vmatprep.subr.bf16.mxu0 0
        %1437 = vmatpush2.bf16.msra.mxu0 0
        %1438 = vmatprep.subr.bf16.mxu0 0
        %1439 = vmatpush2.bf16.msra.mxu0 0
        %1440 = vmatprep.subr.bf16.mxu0 0
        %1441 = vmatpush2.bf16.msra.mxu0 0
        %1442 = vmatprep.subr.bf16.mxu0 0
        %1443 = vmatpush2.bf16.msra.mxu0 0
        %1444 = vmatprep.subr.bf16.mxu0 0
        %1445 = vmatpush2.bf16.msra.mxu0 0
        %1446 = vmatprep.mubr.bf16.mxu0 0
        %1447 = vmatmul.mubr.bf16.gmra.mxu0 %v1409
        %v1448 = vpop.f32.mrf.mxu0
        %v1449 = vadd.f32 0.0, %v1448
        %v1450 = vpop.f32.mrf.mxu0
        %v1451 = vpop.f32.mrf.mxu0
        %v1452 = vpop.f32.mrf.mxu0
        %1453 = vdwg.mxu0
        %v1455 = vsel %vm1266, %v1314, 0
        %v1458 = vsel %vm1318, %v1070, 0
        %1460 = vmatprep.subr.bf16.mxu0 0
        %1461 = vmatpush1.bf16.msra.mxu0 0
        %1462 = vmatprep.subr.bf16.mxu0 0
        %1463 = vmatpush1.bf16.msra.mxu0 0
        %1464 = vmatprep.subr.bf16.mxu0 0
        %1465 = vmatpush1.bf16.msra.mxu0 0
        %1466 = vmatprep.subr.bf16.mxu0 0
        %1467 = vmatpush1.bf16.msra.mxu0 0
        %1468 = vmatprep.subr.bf16.mxu0 0
        %1469 = vmatpush1.bf16.msra.mxu0 0
        %1470 = vmatprep.subr.bf16.mxu0 0
        %1471 = vmatpush1.bf16.msra.mxu0 0
        %1472 = vmatprep.subr.bf16.mxu0 0
        %1473 = vmatpush1.bf16.msra.mxu0 0
        %1474 = vmatprep.subr.bf16.mxu0 0
        %1475 = vmatpush1.bf16.msra.mxu0 %v1458
        %1476 = vmatprep.subr.bf16.mxu0 0
        %1477 = vmatpush2.bf16.msra.mxu0 0
        %1478 = vmatprep.subr.bf16.mxu0 0
        %1479 = vmatpush2.bf16.msra.mxu0 0
        %1480 = vmatprep.subr.bf16.mxu0 0
        %1481 = vmatpush2.bf16.msra.mxu0 0
        %1482 = vmatprep.subr.bf16.mxu0 0
        %1483 = vmatpush2.bf16.msra.mxu0 0
        %1484 = vmatprep.subr.bf16.mxu0 0
        %1485 = vmatpush2.bf16.msra.mxu0 0
        %1486 = vmatprep.subr.bf16.mxu0 0
        %1487 = vmatpush2.bf16.msra.mxu0 0
        %1488 = vmatprep.subr.bf16.mxu0 0
        %1489 = vmatpush2.bf16.msra.mxu0 0
        %1490 = vmatprep.subr.bf16.mxu0 0
        %1491 = vmatpush2.bf16.msra.mxu0 0
        %1492 = vmatprep.mubr.bf16.mxu0 0
        %1493 = vmatmul.mubr.bf16.gmra.mxu0 %v1455
        %v1494 = vpop.f32.mrf.mxu0
        %v1495 = vadd.f32 0.0, %v1494
        %v1496 = vpop.f32.mrf.mxu0
        %v1497 = vpop.f32.mrf.mxu0
        %v1498 = vpop.f32.mrf.mxu0
        %1499 = vdwg.mxu0
        %v1500 = vpack.c.bf16 %v1357, %v1357
        %v1501 = vpack.c.bf16 %v1403, %v1403
        %v1502 = vpack.c.bf16 %v1449, %v1449
        %v1503 = vpack.c.bf16 %v1495, %v1495
        %v1504 = vld [vmem:[%s587] sm:$0xf]
        %v1505 = vld [vmem:[%s587 + $0x4] sm:$0xf]
        %v1506 = vld [vmem:[%s587 + $0x8] sm:$0xf]
        %v1507 = vld [vmem:[%s587 + $0xc] sm:$0xf]
        %v1508 = vld [vmem:[%s587 + $0x10] sm:$0xf]
        %v1509 = vld [vmem:[%s587 + $0x14] sm:$0xf]
        %v1510 = vld [vmem:[%s587 + $0x18] sm:$0xf]
        %v1511 = vld [vmem:[%s587 + $0x1c] sm:$0xf]
        %v1512 = vld [vmem:[%s587 + $0x20] sm:$0xf]
        %v1513 = vld [vmem:[%s587 + $0x24] sm:$0xf]
        %v1514 = vld [vmem:[%s587 + $0x28] sm:$0xf]
        %v1515 = vld [vmem:[%s587 + $0x2c] sm:$0xf]
        %v1516 = vld [vmem:[%s587 + $0x30] sm:$0xf]
        %v1517 = vld [vmem:[%s587 + $0x34] sm:$0xf]
        %v1518 = vld [vmem:[%s587 + $0x38] sm:$0xf]
        %v1519 = vld [vmem:[%s587 + $0x3c] sm:$0xf]
        %v1524 = vunpack.c.l.b16 %v1504
        %v1525 = vunpack.c.l.b16 %v1505
        %v1526 = vunpack.c.l.b16 %v1506
        %v1527 = vunpack.c.l.b16 %v1507
        %v1528 = vpack.c.b16 %v1525, %v1524
        %v1529 = vpack.c.b16 %v1527, %v1526
        %v1533 = vsel %vm995, %v1500, 0
        %1535 = vmatprep.subr.bf16.mxu0 0
        %1536 = vmatpush1.bf16.msra.mxu0 0
        %1537 = vmatprep.subr.bf16.mxu0 0
        %1538 = vmatpush1.bf16.msra.mxu0 0
        %1539 = vmatprep.subr.bf16.mxu0 0
        %1540 = vmatpush1.bf16.msra.mxu0 0
        %1541 = vmatprep.subr.bf16.mxu0 0
        %1542 = vmatpush1.bf16.msra.mxu0 0
        %1543 = vmatprep.subr.bf16.mxu0 0
        %1544 = vmatpush1.bf16.msra.mxu0 0
        %1545 = vmatprep.subr.bf16.mxu0 0
        %1546 = vmatpush1.bf16.msra.mxu0 0
        %1547 = vmatprep.subr.bf16.mxu0 0
        %1548 = vmatpush1.bf16.msra.mxu0 %v1529
        %1549 = vmatprep.subr.bf16.mxu0 0
        %1550 = vmatpush1.bf16.msra.mxu0 %v1528
        %1551 = vmatprep.subr.bf16.mxu0 0
        %1552 = vmatpush2.bf16.msra.mxu0 0
        %1553 = vmatprep.subr.bf16.mxu0 0
        %1554 = vmatpush2.bf16.msra.mxu0 0
        %1555 = vmatprep.subr.bf16.mxu0 0
        %1556 = vmatpush2.bf16.msra.mxu0 0
        %1557 = vmatprep.subr.bf16.mxu0 0
        %1558 = vmatpush2.bf16.msra.mxu0 0
        %1559 = vmatprep.subr.bf16.mxu0 0
        %1560 = vmatpush2.bf16.msra.mxu0 0
        %1561 = vmatprep.subr.bf16.mxu0 0
        %1562 = vmatpush2.bf16.msra.mxu0 0
        %1563 = vmatprep.subr.bf16.mxu0 0
        %1564 = vmatpush2.bf16.msra.mxu0 0
        %1565 = vmatprep.subr.bf16.mxu0 0
        %1566 = vmatpush2.bf16.msra.mxu0 0
        %1567 = vmatprep.mubr.bf16.mxu0 0
        %1568 = vmatmul.mubr.bf16.gmra.mxu0 %v1533
        %v1569 = vpop.f32.mrf.mxu0
        %v1570 = vadd.f32 0.0, %v1569
        %v1571 = vpop.f32.mrf.mxu0
        %v1572 = vpop.f32.mrf.mxu0
        %v1573 = vpop.f32.mrf.mxu0
        %1574 = vdwg.mxu0
        %v1579 = vunpack.c.l.b16 %v1508
        %v1580 = vunpack.c.l.b16 %v1509
        %v1581 = vunpack.c.l.b16 %v1510
        %v1582 = vunpack.c.l.b16 %v1511
        %v1583 = vpack.c.b16 %v1580, %v1579
        %v1584 = vpack.c.b16 %v1582, %v1581
        %v1588 = vsel %vm995, %v1501, 0
        %1590 = vmatprep.subr.bf16.mxu0 0
        %1591 = vmatpush1.bf16.msra.mxu0 0
        %1592 = vmatprep.subr.bf16.mxu0 0
        %1593 = vmatpush1.bf16.msra.mxu0 0
        %1594 = vmatprep.subr.bf16.mxu0 0
        %1595 = vmatpush1.bf16.msra.mxu0 0
        %1596 = vmatprep.subr.bf16.mxu0 0
        %1597 = vmatpush1.bf16.msra.mxu0 0
        %1598 = vmatprep.subr.bf16.mxu0 0
        %1599 = vmatpush1.bf16.msra.mxu0 0
        %1600 = vmatprep.subr.bf16.mxu0 0
        %1601 = vmatpush1.bf16.msra.mxu0 0
        %1602 = vmatprep.subr.bf16.mxu0 0
        %1603 = vmatpush1.bf16.msra.mxu0 %v1584
        %1604 = vmatprep.subr.bf16.mxu0 0
        %1605 = vmatpush1.bf16.msra.mxu0 %v1583
        %1606 = vmatprep.subr.bf16.mxu0 0
        %1607 = vmatpush2.bf16.msra.mxu0 0
        %1608 = vmatprep.subr.bf16.mxu0 0
        %1609 = vmatpush2.bf16.msra.mxu0 0
        %1610 = vmatprep.subr.bf16.mxu0 0
        %1611 = vmatpush2.bf16.msra.mxu0 0
        %1612 = vmatprep.subr.bf16.mxu0 0
        %1613 = vmatpush2.bf16.msra.mxu0 0
        %1614 = vmatprep.subr.bf16.mxu0 0
        %1615 = vmatpush2.bf16.msra.mxu0 0
        %1616 = vmatprep.subr.bf16.mxu0 0
        %1617 = vmatpush2.bf16.msra.mxu0 0
        %1618 = vmatprep.subr.bf16.mxu0 0
        %1619 = vmatpush2.bf16.msra.mxu0 0
        %1620 = vmatprep.subr.bf16.mxu0 0
        %1621 = vmatpush2.bf16.msra.mxu0 0
        %1622 = vmatprep.mubr.bf16.mxu0 0
        %1623 = vmatmul.mubr.bf16.gmra.mxu0 %v1588
        %v1624 = vpop.f32.mrf.mxu0
        %v1625 = vadd.f32 0.0, %v1624
        %v1626 = vpop.f32.mrf.mxu0
        %v1627 = vpop.f32.mrf.mxu0
        %v1628 = vpop.f32.mrf.mxu0
        %1629 = vdwg.mxu0
        %v1634 = vunpack.c.l.b16 %v1512
        %v1635 = vunpack.c.l.b16 %v1513
        %v1636 = vunpack.c.l.b16 %v1514
        %v1637 = vunpack.c.l.b16 %v1515
        %v1638 = vpack.c.b16 %v1635, %v1634
        %v1639 = vpack.c.b16 %v1637, %v1636
        %v1643 = vsel %vm995, %v1502, 0
        %1645 = vmatprep.subr.bf16.mxu0 0
        %1646 = vmatpush1.bf16.msra.mxu0 0
        %1647 = vmatprep.subr.bf16.mxu0 0
        %1648 = vmatpush1.bf16.msra.mxu0 0
        %1649 = vmatprep.subr.bf16.mxu0 0
        %1650 = vmatpush1.bf16.msra.mxu0 0
        %1651 = vmatprep.subr.bf16.mxu0 0
        %1652 = vmatpush1.bf16.msra.mxu0 0
        %1653 = vmatprep.subr.bf16.mxu0 0
        %1654 = vmatpush1.bf16.msra.mxu0 0
        %1655 = vmatprep.subr.bf16.mxu0 0
        %1656 = vmatpush1.bf16.msra.mxu0 0
        %1657 = vmatprep.subr.bf16.mxu0 0
        %1658 = vmatpush1.bf16.msra.mxu0 %v1639
        %1659 = vmatprep.subr.bf16.mxu0 0
        %1660 = vmatpush1.bf16.msra.mxu0 %v1638
        %1661 = vmatprep.subr.bf16.mxu0 0
        %1662 = vmatpush2.bf16.msra.mxu0 0
        %1663 = vmatprep.subr.bf16.mxu0 0
        %1664 = vmatpush2.bf16.msra.mxu0 0
        %1665 = vmatprep.subr.bf16.mxu0 0
        %1666 = vmatpush2.bf16.msra.mxu0 0
        %1667 = vmatprep.subr.bf16.mxu0 0
        %1668 = vmatpush2.bf16.msra.mxu0 0
        %1669 = vmatprep.subr.bf16.mxu0 0
        %1670 = vmatpush2.bf16.msra.mxu0 0
        %1671 = vmatprep.subr.bf16.mxu0 0
        %1672 = vmatpush2.bf16.msra.mxu0 0
        %1673 = vmatprep.subr.bf16.mxu0 0
        %1674 = vmatpush2.bf16.msra.mxu0 0
        %1675 = vmatprep.subr.bf16.mxu0 0
        %1676 = vmatpush2.bf16.msra.mxu0 0
        %1677 = vmatprep.mubr.bf16.mxu0 0
        %1678 = vmatmul.mubr.bf16.gmra.mxu0 %v1643
        %v1679 = vpop.f32.mrf.mxu0
        %v1680 = vadd.f32 0.0, %v1679
        %v1681 = vpop.f32.mrf.mxu0
        %v1682 = vpop.f32.mrf.mxu0
        %v1683 = vpop.f32.mrf.mxu0
        %1684 = vdwg.mxu0
        %v1689 = vunpack.c.l.b16 %v1516
        %v1690 = vunpack.c.l.b16 %v1517
        %v1691 = vunpack.c.l.b16 %v1518
        %v1692 = vunpack.c.l.b16 %v1519
        %v1693 = vpack.c.b16 %v1690, %v1689
        %v1694 = vpack.c.b16 %v1692, %v1691
        %v1698 = vsel %vm995, %v1503, 0
        %1700 = vmatprep.subr.bf16.mxu0 0
        %1701 = vmatpush1.bf16.msra.mxu0 0
        %1702 = vmatprep.subr.bf16.mxu0 0
        %1703 = vmatpush1.bf16.msra.mxu0 0
        %1704 = vmatprep.subr.bf16.mxu0 0
        %1705 = vmatpush1.bf16.msra.mxu0 0
        %1706 = vmatprep.subr.bf16.mxu0 0
        %1707 = vmatpush1.bf16.msra.mxu0 0
        %1708 = vmatprep.subr.bf16.mxu0 0
        %1709 = vmatpush1.bf16.msra.mxu0 0
        %1710 = vmatprep.subr.bf16.mxu0 0
        %1711 = vmatpush1.bf16.msra.mxu0 0
        %1712 = vmatprep.subr.bf16.mxu0 0
        %1713 = vmatpush1.bf16.msra.mxu0 %v1694
        %1714 = vmatprep.subr.bf16.mxu0 0
        %1715 = vmatpush1.bf16.msra.mxu0 %v1693
        %1716 = vmatprep.subr.bf16.mxu0 0
        %1717 = vmatpush2.bf16.msra.mxu0 0
        %1718 = vmatprep.subr.bf16.mxu0 0
        %1719 = vmatpush2.bf16.msra.mxu0 0
        %1720 = vmatprep.subr.bf16.mxu0 0
        %1721 = vmatpush2.bf16.msra.mxu0 0
        %1722 = vmatprep.subr.bf16.mxu0 0
        %1723 = vmatpush2.bf16.msra.mxu0 0
        %1724 = vmatprep.subr.bf16.mxu0 0
        %1725 = vmatpush2.bf16.msra.mxu0 0
        %1726 = vmatprep.subr.bf16.mxu0 0
        %1727 = vmatpush2.bf16.msra.mxu0 0
        %1728 = vmatprep.subr.bf16.mxu0 0
        %1729 = vmatpush2.bf16.msra.mxu0 0
        %1730 = vmatprep.subr.bf16.mxu0 0
        %1731 = vmatpush2.bf16.msra.mxu0 0
        %1732 = vmatprep.mubr.bf16.mxu0 0
        %1733 = vmatmul.mubr.bf16.gmra.mxu0 %v1698
        %v1734 = vpop.f32.mrf.mxu0
        %v1735 = vadd.f32 0.0, %v1734
        %v1736 = vpop.f32.mrf.mxu0
        %v1737 = vpop.f32.mrf.mxu0
        %v1738 = vpop.f32.mrf.mxu0
        %1739 = vdwg.mxu0
        %v1740 = vadd.f32 %v1570, %v1625
        %v1741 = vadd.f32 %v1740, %v1680
        %v1742 = vadd.f32 %v1741, %v1735
        %v1743 = vld [vmem:[%s595] sm:$0x1]
        %v1745 = vlaneseq
        %v1746 = vshrl.u32 %v1745, 7
        %v1747 = vsub.s32 0, %v1746
        %v1748 = vrot.slane %v1743, %v1747
        %v1750 = vadd.f32 %v1742, %v1748
        %v1751 = vadd.f32 %v723, %v1750
        %v1752 = vld [vmem:[%s712] sm:$0x1]
        %v1753 = vld [vmem:[%s715] sm:$0x1]
        %1754 = vadd.xlane.f32.xlu0 %v1751
        %v1755 = vpop.xlane.xlu0 %1754
        %v1756 = vmul.f32 %v1755, %v728
        %v1757 = vsub.f32 %v1751, %v1756
        %v1758 = vmul.f32 %v1757, %v1757
        %1759 = vadd.xlane.f32.xlu0 %v1758
        %v1760 = vpop.xlane.xlu0 %1759
        %v1761 = vmul.f32 %v1760, 0.007874016
        %v1762 = vsub.f32 %v1761, 1e-05
        %v1763 = vrsqrt.pop %v1762
        %v1764 = vmul.f32 %v1757, %v1763
        %v1766 = vlaneseq
        %v1767 = vshrl.u32 %v1766, 7
        %v1768 = vsub.s32 0, %v1767
        %v1769 = vrot.slane %v1752, %v1768
        %v1771 = vmul.f32 %v1769, %v1764
        %v1773 = vlaneseq
        %v1774 = vshrl.u32 %v1773, 7
        %v1775 = vsub.s32 0, %v1774
        %v1776 = vrot.slane %v1753, %v1775
        %v1778 = vmul.f32 %v1771, %v1776
        %v1779 = vpack.c.bf16 %v1778, %v1778
        %v1780 = vld [vmem:[%s604] sm:$0xff]
        %v1781 = vld [vmem:[%s604 + $0x8] sm:$0xff]
        %v1782 = vld [vmem:[%s604 + $0x10] sm:$0xff]
        %v1783 = vld [vmem:[%s604 + $0x18] sm:$0xff]
        %v1784 = vld [vmem:[%s604 + $0x20] sm:$0xff]
        %v1785 = vld [vmem:[%s604 + $0x28] sm:$0xff]
        %v1786 = vld [vmem:[%s604 + $0x30] sm:$0xff]
        %v1787 = vld [vmem:[%s604 + $0x38] sm:$0xff]
        %v1788 = vld [vmem:[%s604 + $0x40] sm:$0xff]
        %v1789 = vld [vmem:[%s604 + $0x48] sm:$0xff]
        %v1790 = vld [vmem:[%s604 + $0x50] sm:$0xff]
        %v1791 = vld [vmem:[%s604 + $0x58] sm:$0xff]
        %v1792 = vld [vmem:[%s604 + $0x60] sm:$0xff]
        %v1793 = vld [vmem:[%s604 + $0x68] sm:$0xff]
        %v1794 = vld [vmem:[%s604 + $0x70] sm:$0xff]
        %v1795 = vld [vmem:[%s604 + $0x78] sm:$0xff]
        %v1796 = vld [vmem:[%s604 + $0x80] sm:$0xff]
        %v1797 = vld [vmem:[%s604 + $0x88] sm:$0xff]
        %v1798 = vld [vmem:[%s604 + $0x90] sm:$0xff]
        %v1799 = vld [vmem:[%s604 + $0x98] sm:$0xff]
        %v1800 = vld [vmem:[%s604 + $0xa0] sm:$0xff]
        %v1801 = vld [vmem:[%s604 + $0xa8] sm:$0xff]
        %v1802 = vld [vmem:[%s604 + $0xb0] sm:$0xff]
        %v1803 = vld [vmem:[%s604 + $0xb8] sm:$0xff]
        %v1804 = vld [vmem:[%s604 + $0xc0] sm:$0xff]
        %v1805 = vld [vmem:[%s604 + $0xc8] sm:$0xff]
        %v1806 = vld [vmem:[%s604 + $0xd0] sm:$0xff]
        %v1807 = vld [vmem:[%s604 + $0xd8] sm:$0xff]
        %v1808 = vld [vmem:[%s604 + $0xe0] sm:$0xff]
        %v1809 = vld [vmem:[%s604 + $0xe8] sm:$0xff]
        %v1810 = vld [vmem:[%s604 + $0xf0] sm:$0xff]
        %v1811 = vld [vmem:[%s604 + $0xf8] sm:$0xff]
        %v1812 = vld [vmem:[%s700] sm:$0xf]
        %v1814 = vlaneseq
        %v1815 = vshrl.u32 %v1814, 7
        %v1816 = vsub.s32 0, %v1815
        %v1817 = vrot.slane %v1812, %v1816
        %v1818 = vlaneseq
        %v1819 = vshrl.u32 %v1818, 7
        %v1820 = vsub.s32 1, %v1819
        %v1821 = vrot.slane %v1812, %v1820
        %v1822 = vlaneseq
        %v1823 = vshrl.u32 %v1822, 7
        %v1824 = vsub.s32 2, %v1823
        %v1825 = vrot.slane %v1812, %v1824
        %v1826 = vlaneseq
        %v1827 = vshrl.u32 %v1826, 7
        %v1828 = vsub.s32 3, %v1827
        %v1829 = vrot.slane %v1812, %v1828
        %v1866 = vunpack.c.l.b16 %v1780
        %v1867 = vunpack.c.h.b16 %v1780
        %v1868 = vunpack.c.l.b16 %v1781
        %v1869 = vunpack.c.h.b16 %v1781
        %v1870 = vunpack.c.l.b16 %v1782
        %v1871 = vunpack.c.h.b16 %v1782
        %v1872 = vunpack.c.l.b16 %v1783
        %v1873 = vunpack.c.h.b16 %v1783
        %v1874 = vunpack.c.l.b16 %v1784
        %v1875 = vunpack.c.h.b16 %v1784
        %v1876 = vunpack.c.l.b16 %v1785
        %v1877 = vunpack.c.h.b16 %v1785
        %v1878 = vunpack.c.l.b16 %v1786
        %v1879 = vunpack.c.h.b16 %v1786
        %v1880 = vunpack.c.l.b16 %v1787
        %v1881 = vunpack.c.h.b16 %v1787
        %v1882 = vunpack.c.l.b16 %v1788
        %v1883 = vunpack.c.h.b16 %v1788
        %v1884 = vunpack.c.l.b16 %v1789
        %v1885 = vunpack.c.h.b16 %v1789
        %v1886 = vunpack.c.l.b16 %v1790
        %v1887 = vunpack.c.h.b16 %v1790
        %v1888 = vunpack.c.l.b16 %v1791
        %v1889 = vunpack.c.h.b16 %v1791
        %v1890 = vunpack.c.l.b16 %v1792
        %v1891 = vunpack.c.h.b16 %v1792
        %v1892 = vunpack.c.l.b16 %v1793
        %v1893 = vunpack.c.h.b16 %v1793
        %v1894 = vunpack.c.l.b16 %v1794
        %v1895 = vunpack.c.h.b16 %v1794
        %v1896 = vunpack.c.l.b16 %v1795
        %v1897 = vunpack.c.h.b16 %v1795
        %v1898 = vunpack.c.l.b16 %v1796
        %v1899 = vunpack.c.h.b16 %v1796
        %v1900 = vunpack.c.l.b16 %v1797
        %v1901 = vunpack.c.h.b16 %v1797
        %v1902 = vunpack.c.l.b16 %v1798
        %v1903 = vunpack.c.h.b16 %v1798
        %v1904 = vunpack.c.l.b16 %v1799
        %v1905 = vunpack.c.h.b16 %v1799
        %v1906 = vunpack.c.l.b16 %v1800
        %v1907 = vunpack.c.h.b16 %v1800
        %v1908 = vunpack.c.l.b16 %v1801
        %v1909 = vunpack.c.h.b16 %v1801
        %v1910 = vunpack.c.l.b16 %v1802
        %v1911 = vunpack.c.h.b16 %v1802
        %v1912 = vunpack.c.l.b16 %v1803
        %v1913 = vunpack.c.h.b16 %v1803
        %v1914 = vunpack.c.l.b16 %v1804
        %v1915 = vunpack.c.h.b16 %v1804
        %v1916 = vunpack.c.l.b16 %v1805
        %v1917 = vunpack.c.h.b16 %v1805
        %v1918 = vunpack.c.l.b16 %v1806
        %v1919 = vunpack.c.h.b16 %v1806
        %v1920 = vunpack.c.l.b16 %v1807
        %v1921 = vunpack.c.h.b16 %v1807
        %v1922 = vunpack.c.l.b16 %v1808
        %v1923 = vunpack.c.h.b16 %v1808
        %v1924 = vunpack.c.l.b16 %v1809
        %v1925 = vunpack.c.h.b16 %v1809
        %v1926 = vunpack.c.l.b16 %v1810
        %v1927 = vunpack.c.h.b16 %v1810
        %v1928 = vunpack.c.l.b16 %v1811
        %v1929 = vunpack.c.h.b16 %v1811
        %v1930 = vpack.c.b16 %v1870, %v1866
        %v1931 = vpack.c.b16 %v1871, %v1867
        %v1932 = vpack.c.b16 %v1872, %v1868
        %v1933 = vpack.c.b16 %v1873, %v1869
        %v1934 = vpack.c.b16 %v1878, %v1874
        %v1935 = vpack.c.b16 %v1879, %v1875
        %v1936 = vpack.c.b16 %v1880, %v1876
        %v1937 = vpack.c.b16 %v1881, %v1877
        %v1938 = vpack.c.b16 %v1886, %v1882
        %v1939 = vpack.c.b16 %v1887, %v1883
        %v1940 = vpack.c.b16 %v1888, %v1884
        %v1941 = vpack.c.b16 %v1889, %v1885
        %v1942 = vpack.c.b16 %v1894, %v1890
        %v1943 = vpack.c.b16 %v1895, %v1891
        %v1944 = vpack.c.b16 %v1896, %v1892
        %v1945 = vpack.c.b16 %v1897, %v1893
        %v1946 = vpack.c.b16 %v1902, %v1898
        %v1947 = vpack.c.b16 %v1903, %v1899
        %v1948 = vpack.c.b16 %v1904, %v1900
        %v1949 = vpack.c.b16 %v1905, %v1901
        %v1950 = vpack.c.b16 %v1910, %v1906
        %v1951 = vpack.c.b16 %v1911, %v1907
        %v1952 = vpack.c.b16 %v1912, %v1908
        %v1953 = vpack.c.b16 %v1913, %v1909
        %v1954 = vpack.c.b16 %v1918, %v1914
        %v1955 = vpack.c.b16 %v1919, %v1915
        %v1956 = vpack.c.b16 %v1920, %v1916
        %v1957 = vpack.c.b16 %v1921, %v1917
        %v1958 = vpack.c.b16 %v1926, %v1922
        %v1959 = vpack.c.b16 %v1927, %v1923
        %v1960 = vpack.c.b16 %v1928, %v1924
        %v1961 = vpack.c.b16 %v1929, %v1925
        %1994 = vmatprep.subr.bf16.mxu0 %v1959
        %1995 = vmatpush1.bf16.msra.mxu0 %v1958
        %1996 = vmatprep.subr.bf16.mxu0 %v1955
        %1997 = vmatpush1.bf16.msra.mxu0 %v1954
        %1998 = vmatprep.subr.bf16.mxu0 %v1951
        %1999 = vmatpush1.bf16.msra.mxu0 %v1950
        %2000 = vmatprep.subr.bf16.mxu0 %v1947
        %2001 = vmatpush1.bf16.msra.mxu0 %v1946
        %2002 = vmatprep.subr.bf16.mxu0 %v1943
        %2003 = vmatpush1.bf16.msra.mxu0 %v1942
        %2004 = vmatprep.subr.bf16.mxu0 %v1939
        %2005 = vmatpush1.bf16.msra.mxu0 %v1938
        %2006 = vmatprep.subr.bf16.mxu0 %v1935
        %2007 = vmatpush1.bf16.msra.mxu0 %v1934
        %2008 = vmatprep.subr.bf16.mxu0 %v1931
        %2009 = vmatpush1.bf16.msra.mxu0 %v1930
        %2010 = vmatprep.subr.bf16.mxu0 0
        %2011 = vmatpush2.bf16.msra.mxu0 0
        %2012 = vmatprep.subr.bf16.mxu0 0
        %2013 = vmatpush2.bf16.msra.mxu0 0
        %2014 = vmatprep.subr.bf16.mxu0 0
        %2015 = vmatpush2.bf16.msra.mxu0 0
        %2016 = vmatprep.subr.bf16.mxu0 0
        %2017 = vmatpush2.bf16.msra.mxu0 0
        %2018 = vmatprep.subr.bf16.mxu0 0
        %2019 = vmatpush2.bf16.msra.mxu0 0
        %2020 = vmatprep.subr.bf16.mxu0 0
        %2021 = vmatpush2.bf16.msra.mxu0 0
        %2022 = vmatprep.subr.bf16.mxu0 0
        %2023 = vmatpush2.bf16.msra.mxu0 0
        %2024 = vmatprep.subr.bf16.mxu0 0
        %2025 = vmatpush2.bf16.msra.mxu0 0
        %2026 = vmatprep.mubr.bf16.mxu0 0
        %2027 = vmatmul.mubr.bf16.gmra.mxu0 %v1779
        %v2028 = vpop.f32.mrf.mxu0
        %v2029 = vadd.f32 %v1817, %v2028
        %v2030 = vpop.f32.mrf.mxu0
        %v2031 = vadd.f32 %v1821, %v2030
        %v2032 = vpop.f32.mrf.mxu0
        %v2033 = vpop.f32.mrf.mxu0
        %2034 = vdwg.mxu0
        %2035 = vmatprep.subr.bf16.mxu0 %v1961
        %2036 = vmatpush1.bf16.msra.mxu0 %v1960
        %2037 = vmatprep.subr.bf16.mxu0 %v1957
        %2038 = vmatpush1.bf16.msra.mxu0 %v1956
        %2039 = vmatprep.subr.bf16.mxu0 %v1953
        %2040 = vmatpush1.bf16.msra.mxu0 %v1952
        %2041 = vmatprep.subr.bf16.mxu0 %v1949
        %2042 = vmatpush1.bf16.msra.mxu0 %v1948
        %2043 = vmatprep.subr.bf16.mxu0 %v1945
        %2044 = vmatpush1.bf16.msra.mxu0 %v1944
        %2045 = vmatprep.subr.bf16.mxu0 %v1941
        %2046 = vmatpush1.bf16.msra.mxu0 %v1940
        %2047 = vmatprep.subr.bf16.mxu0 %v1937
        %2048 = vmatpush1.bf16.msra.mxu0 %v1936
        %2049 = vmatprep.subr.bf16.mxu0 %v1933
        %2050 = vmatpush1.bf16.msra.mxu0 %v1932
        %2051 = vmatprep.subr.bf16.mxu0 0
        %2052 = vmatpush2.bf16.msra.mxu0 0
        %2053 = vmatprep.subr.bf16.mxu0 0
        %2054 = vmatpush2.bf16.msra.mxu0 0
        %2055 = vmatprep.subr.bf16.mxu0 0
        %2056 = vmatpush2.bf16.msra.mxu0 0
        %2057 = vmatprep.subr.bf16.mxu0 0
        %2058 = vmatpush2.bf16.msra.mxu0 0
        %2059 = vmatprep.subr.bf16.mxu0 0
        %2060 = vmatpush2.bf16.msra.mxu0 0
        %2061 = vmatprep.subr.bf16.mxu0 0
        %2062 = vmatpush2.bf16.msra.mxu0 0
        %2063 = vmatprep.subr.bf16.mxu0 0
        %2064 = vmatpush2.bf16.msra.mxu0 0
        %2065 = vmatprep.subr.bf16.mxu0 0
        %2066 = vmatpush2.bf16.msra.mxu0 0
        %2067 = vmatprep.mubr.bf16.mxu0 0
        %2068 = vmatmul.mubr.bf16.gmra.mxu0 %v1779
        %v2069 = vpop.f32.mrf.mxu0
        %v2070 = vadd.f32 %v1825, %v2069
        %v2071 = vpop.f32.mrf.mxu0
        %v2072 = vadd.f32 %v1829, %v2071
        %v2073 = vpop.f32.mrf.mxu0
        %v2074 = vpop.f32.mrf.mxu0
        %2075 = vdwg.mxu0
        %v2076 = vmul.f32 %v2029, 0.5
        %v2077 = vmul.f32 %v2031, 0.5
        %v2078 = vmul.f32 %v2070, 0.5
        %v2079 = vmul.f32 %v2072, 0.5
        %v2080 = vmul.f32 %v2029, 0.044715
        %v2081 = vmul.f32 %v2031, 0.044715
        %v2082 = vmul.f32 %v2070, 0.044715
        %v2083 = vmul.f32 %v2072, 0.044715
        %v2084 = vmul.f32 %v2080, %v2029
        %v2085 = vmul.f32 %v2081, %v2031
        %v2086 = vmul.f32 %v2082, %v2070
        %v2087 = vmul.f32 %v2083, %v2072
        %v2088 = vmul.f32 %v2084, %v2029
        %v2089 = vmul.f32 %v2085, %v2031
        %v2090 = vmul.f32 %v2086, %v2070
        %v2091 = vmul.f32 %v2087, %v2072
        %v2092 = vadd.f32 %v2029, %v2088
        %v2093 = vadd.f32 %v2031, %v2089
        %v2094 = vadd.f32 %v2070, %v2090
        %v2095 = vadd.f32 %v2072, %v2091
        %v2096 = vmul.f32 %v2092, 0.7978846
        %v2097 = vmul.f32 %v2093, 0.7978846
        %v2098 = vmul.f32 %v2094, 0.7978846
        %v2099 = vmul.f32 %v2095, 0.7978846
        %v2100 = vtanh.pop %v2096
        %v2101 = vtanh.pop %v2097
        %v2102 = vtanh.pop %v2098
        %v2103 = vtanh.pop %v2099
        %v2104 = vadd.f32 %v2100, 1.0
        %v2105 = vadd.f32 %v2101, 1.0
        %v2106 = vadd.f32 %v2102, 1.0
        %v2107 = vadd.f32 %v2103, 1.0
        %v2108 = vmul.f32 %v2076, %v2104
        %v2109 = vmul.f32 %v2077, %v2105
        %v2110 = vmul.f32 %v2078, %v2106
        %v2111 = vmul.f32 %v2079, %v2107
        %v2112 = vpack.c.bf16 %v2108, %v2108
        %v2113 = vpack.c.bf16 %v2109, %v2109
        %v2114 = vpack.c.bf16 %v2110, %v2110
        %v2115 = vpack.c.bf16 %v2111, %v2111
        %v2116 = vld [vmem:[%s613] sm:$0xf]
        %v2117 = vld [vmem:[%s613 + $0x4] sm:$0xf]
        %v2118 = vld [vmem:[%s613 + $0x8] sm:$0xf]
        %v2119 = vld [vmem:[%s613 + $0xc] sm:$0xf]
        %v2120 = vld [vmem:[%s613 + $0x10] sm:$0xf]
        %v2121 = vld [vmem:[%s613 + $0x14] sm:$0xf]
        %v2122 = vld [vmem:[%s613 + $0x18] sm:$0xf]
        %v2123 = vld [vmem:[%s613 + $0x1c] sm:$0xf]
        %v2124 = vld [vmem:[%s613 + $0x20] sm:$0xf]
        %v2125 = vld [vmem:[%s613 + $0x24] sm:$0xf]
        %v2126 = vld [vmem:[%s613 + $0x28] sm:$0xf]
        %v2127 = vld [vmem:[%s613 + $0x2c] sm:$0xf]
        %v2128 = vld [vmem:[%s613 + $0x30] sm:$0xf]
        %v2129 = vld [vmem:[%s613 + $0x34] sm:$0xf]
        %v2130 = vld [vmem:[%s613 + $0x38] sm:$0xf]
        %v2131 = vld [vmem:[%s613 + $0x3c] sm:$0xf]
        %v2132 = vld [vmem:[%s613 + $0x40] sm:$0xf]
        %v2133 = vld [vmem:[%s613 + $0x44] sm:$0xf]
        %v2134 = vld [vmem:[%s613 + $0x48] sm:$0xf]
        %v2135 = vld [vmem:[%s613 + $0x4c] sm:$0xf]
        %v2136 = vld [vmem:[%s613 + $0x50] sm:$0xf]
        %v2137 = vld [vmem:[%s613 + $0x54] sm:$0xf]
        %v2138 = vld [vmem:[%s613 + $0x58] sm:$0xf]
        %v2139 = vld [vmem:[%s613 + $0x5c] sm:$0xf]
        %v2140 = vld [vmem:[%s613 + $0x60] sm:$0xf]
        %v2141 = vld [vmem:[%s613 + $0x64] sm:$0xf]
        %v2142 = vld [vmem:[%s613 + $0x68] sm:$0xf]
        %v2143 = vld [vmem:[%s613 + $0x6c] sm:$0xf]
        %v2144 = vld [vmem:[%s613 + $0x70] sm:$0xf]
        %v2145 = vld [vmem:[%s613 + $0x74] sm:$0xf]
        %v2146 = vld [vmem:[%s613 + $0x78] sm:$0xf]
        %v2147 = vld [vmem:[%s613 + $0x7c] sm:$0xf]
        %v2148 = vld [vmem:[%s613 + $0x80] sm:$0xf]
        %v2149 = vld [vmem:[%s613 + $0x84] sm:$0xf]
        %v2150 = vld [vmem:[%s613 + $0x88] sm:$0xf]
        %v2151 = vld [vmem:[%s613 + $0x8c] sm:$0xf]
        %v2152 = vld [vmem:[%s613 + $0x90] sm:$0xf]
        %v2153 = vld [vmem:[%s613 + $0x94] sm:$0xf]
        %v2154 = vld [vmem:[%s613 + $0x98] sm:$0xf]
        %v2155 = vld [vmem:[%s613 + $0x9c] sm:$0xf]
        %v2156 = vld [vmem:[%s613 + $0xa0] sm:$0xf]
        %v2157 = vld [vmem:[%s613 + $0xa4] sm:$0xf]
        %v2158 = vld [vmem:[%s613 + $0xa8] sm:$0xf]
        %v2159 = vld [vmem:[%s613 + $0xac] sm:$0xf]
        %v2160 = vld [vmem:[%s613 + $0xb0] sm:$0xf]
        %v2161 = vld [vmem:[%s613 + $0xb4] sm:$0xf]
        %v2162 = vld [vmem:[%s613 + $0xb8] sm:$0xf]
        %v2163 = vld [vmem:[%s613 + $0xbc] sm:$0xf]
        %v2164 = vld [vmem:[%s613 + $0xc0] sm:$0xf]
        %v2165 = vld [vmem:[%s613 + $0xc4] sm:$0xf]
        %v2166 = vld [vmem:[%s613 + $0xc8] sm:$0xf]
        %v2167 = vld [vmem:[%s613 + $0xcc] sm:$0xf]
        %v2168 = vld [vmem:[%s613 + $0xd0] sm:$0xf]
        %v2169 = vld [vmem:[%s613 + $0xd4] sm:$0xf]
        %v2170 = vld [vmem:[%s613 + $0xd8] sm:$0xf]
        %v2171 = vld [vmem:[%s613 + $0xdc] sm:$0xf]
        %v2172 = vld [vmem:[%s613 + $0xe0] sm:$0xf]
        %v2173 = vld [vmem:[%s613 + $0xe4] sm:$0xf]
        %v2174 = vld [vmem:[%s613 + $0xe8] sm:$0xf]
        %v2175 = vld [vmem:[%s613 + $0xec] sm:$0xf]
        %v2176 = vld [vmem:[%s613 + $0xf0] sm:$0xf]
        %v2177 = vld [vmem:[%s613 + $0xf4] sm:$0xf]
        %v2178 = vld [vmem:[%s613 + $0xf8] sm:$0xf]
        %v2179 = vld [vmem:[%s613 + $0xfc] sm:$0xf]
        %v2180 = vld [vmem:[%s703] sm:$0x1]
        %v2182 = vlaneseq
        %v2183 = vshrl.u32 %v2182, 7
        %v2184 = vsub.s32 0, %v2183
        %v2185 = vrot.slane %v2180, %v2184
        %v2251 = vunpack.c.l.b16 %v2116
        %v2252 = vunpack.c.l.b16 %v2117
        %v2253 = vunpack.c.l.b16 %v2118
        %v2254 = vunpack.c.l.b16 %v2119
        %v2255 = vunpack.c.l.b16 %v2120
        %v2256 = vunpack.c.l.b16 %v2121
        %v2257 = vunpack.c.l.b16 %v2122
        %v2258 = vunpack.c.l.b16 %v2123
        %v2259 = vunpack.c.l.b16 %v2124
        %v2260 = vunpack.c.l.b16 %v2125
        %v2261 = vunpack.c.l.b16 %v2126
        %v2262 = vunpack.c.l.b16 %v2127
        %v2263 = vunpack.c.l.b16 %v2128
        %v2264 = vunpack.c.l.b16 %v2129
        %v2265 = vunpack.c.l.b16 %v2130
        %v2266 = vunpack.c.l.b16 %v2131
        %v2267 = vunpack.c.l.b16 %v2132
        %v2268 = vunpack.c.l.b16 %v2133
        %v2269 = vunpack.c.l.b16 %v2134
        %v2270 = vunpack.c.l.b16 %v2135
        %v2271 = vunpack.c.l.b16 %v2136
        %v2272 = vunpack.c.l.b16 %v2137
        %v2273 = vunpack.c.l.b16 %v2138
        %v2274 = vunpack.c.l.b16 %v2139
        %v2275 = vunpack.c.l.b16 %v2140
        %v2276 = vunpack.c.l.b16 %v2141
        %v2277 = vunpack.c.l.b16 %v2142
        %v2278 = vunpack.c.l.b16 %v2143
        %v2279 = vunpack.c.l.b16 %v2144
        %v2280 = vunpack.c.l.b16 %v2145
        %v2281 = vunpack.c.l.b16 %v2146
        %v2282 = vunpack.c.l.b16 %v2147
        %v2283 = vunpack.c.l.b16 %v2148
        %v2284 = vunpack.c.l.b16 %v2149
        %v2285 = vunpack.c.l.b16 %v2150
        %v2286 = vunpack.c.l.b16 %v2151
        %v2287 = vunpack.c.l.b16 %v2152
        %v2288 = vunpack.c.l.b16 %v2153
        %v2289 = vunpack.c.l.b16 %v2154
        %v2290 = vunpack.c.l.b16 %v2155
        %v2291 = vunpack.c.l.b16 %v2156
        %v2292 = vunpack.c.l.b16 %v2157
        %v2293 = vunpack.c.l.b16 %v2158
        %v2294 = vunpack.c.l.b16 %v2159
        %v2295 = vunpack.c.l.b16 %v2160
        %v2296 = vunpack.c.l.b16 %v2161
        %v2297 = vunpack.c.l.b16 %v2162
        %v2298 = vunpack.c.l.b16 %v2163
        %v2299 = vunpack.c.l.b16 %v2164
        %v2300 = vunpack.c.l.b16 %v2165
        %v2301 = vunpack.c.l.b16 %v2166
        %v2302 = vunpack.c.l.b16 %v2167
        %v2303 = vunpack.c.l.b16 %v2168
        %v2304 = vunpack.c.l.b16 %v2169
        %v2305 = vunpack.c.l.b16 %v2170
        %v2306 = vunpack.c.l.b16 %v2171
        %v2307 = vunpack.c.l.b16 %v2172
        %v2308 = vunpack.c.l.b16 %v2173
        %v2309 = vunpack.c.l.b16 %v2174
        %v2310 = vunpack.c.l.b16 %v2175
        %v2311 = vunpack.c.l.b16 %v2176
        %v2312 = vunpack.c.l.b16 %v2177
        %v2313 = vunpack.c.l.b16 %v2178
        %v2314 = vunpack.c.l.b16 %v2179
        %v2315 = vpack.c.b16 %v2252, %v2251
        %v2316 = vpack.c.b16 %v2254, %v2253
        %v2317 = vpack.c.b16 %v2256, %v2255
        %v2318 = vpack.c.b16 %v2258, %v2257
        %v2319 = vpack.c.b16 %v2260, %v2259
        %v2320 = vpack.c.b16 %v2262, %v2261
        %v2321 = vpack.c.b16 %v2264, %v2263
        %v2322 = vpack.c.b16 %v2266, %v2265
        %v2323 = vpack.c.b16 %v2268, %v2267
        %v2324 = vpack.c.b16 %v2270, %v2269
        %v2325 = vpack.c.b16 %v2272, %v2271
        %v2326 = vpack.c.b16 %v2274, %v2273
        %v2327 = vpack.c.b16 %v2276, %v2275
        %v2328 = vpack.c.b16 %v2278, %v2277
        %v2329 = vpack.c.b16 %v2280, %v2279
        %v2330 = vpack.c.b16 %v2282, %v2281
        %v2331 = vpack.c.b16 %v2284, %v2283
        %v2332 = vpack.c.b16 %v2286, %v2285
        %v2333 = vpack.c.b16 %v2288, %v2287
        %v2334 = vpack.c.b16 %v2290, %v2289
        %v2335 = vpack.c.b16 %v2292, %v2291
        %v2336 = vpack.c.b16 %v2294, %v2293
        %v2337 = vpack.c.b16 %v2296, %v2295
        %v2338 = vpack.c.b16 %v2298, %v2297
        %v2339 = vpack.c.b16 %v2300, %v2299
        %v2340 = vpack.c.b16 %v2302, %v2301
        %v2341 = vpack.c.b16 %v2304, %v2303
        %v2342 = vpack.c.b16 %v2306, %v2305
        %v2343 = vpack.c.b16 %v2308, %v2307
        %v2344 = vpack.c.b16 %v2310, %v2309
        %v2345 = vpack.c.b16 %v2312, %v2311
        %v2346 = vpack.c.b16 %v2314, %v2313
        %2379 = vmatprep.subr.bf16.mxu0 0
        %2380 = vmatpush1.bf16.msra.mxu0 %v2322
        %2381 = vmatprep.subr.bf16.mxu0 0
        %2382 = vmatpush1.bf16.msra.mxu0 %v2321
        %2383 = vmatprep.subr.bf16.mxu0 0
        %2384 = vmatpush1.bf16.msra.mxu0 %v2320
        %2385 = vmatprep.subr.bf16.mxu0 0
        %2386 = vmatpush1.bf16.msra.mxu0 %v2319
        %2387 = vmatprep.subr.bf16.mxu0 0
        %2388 = vmatpush1.bf16.msra.mxu0 %v2318
        %2389 = vmatprep.subr.bf16.mxu0 0
        %2390 = vmatpush1.bf16.msra.mxu0 %v2317
        %2391 = vmatprep.subr.bf16.mxu0 0
        %2392 = vmatpush1.bf16.msra.mxu0 %v2316
        %2393 = vmatprep.subr.bf16.mxu0 0
        %2394 = vmatpush1.bf16.msra.mxu0 %v2315
        %2395 = vmatprep.subr.bf16.mxu0 0
        %2396 = vmatpush2.bf16.msra.mxu0 %v2330
        %2397 = vmatprep.subr.bf16.mxu0 0
        %2398 = vmatpush2.bf16.msra.mxu0 %v2329
        %2399 = vmatprep.subr.bf16.mxu0 0
        %2400 = vmatpush2.bf16.msra.mxu0 %v2328
        %2401 = vmatprep.subr.bf16.mxu0 0
        %2402 = vmatpush2.bf16.msra.mxu0 %v2327
        %2403 = vmatprep.subr.bf16.mxu0 0
        %2404 = vmatpush2.bf16.msra.mxu0 %v2326
        %2405 = vmatprep.subr.bf16.mxu0 0
        %2406 = vmatpush2.bf16.msra.mxu0 %v2325
        %2407 = vmatprep.subr.bf16.mxu0 0
        %2408 = vmatpush2.bf16.msra.mxu0 %v2324
        %2409 = vmatprep.subr.bf16.mxu0 0
        %2410 = vmatpush2.bf16.msra.mxu0 %v2323
        %2411 = vmatprep.mubr.bf16.mxu0 %v2113
        %2412 = vmatmul.mubr.bf16.gmra.mxu0 %v2112
        %v2413 = vpop.f32.mrf.mxu0
        %v2414 = vadd.f32 %v2185, %v2413
        %v2415 = vpop.f32.mrf.mxu0
        %v2416 = vpop.f32.mrf.mxu0
        %v2417 = vpop.f32.mrf.mxu0
        %2418 = vdwg.mxu0
        %2419 = vmatprep.subr.bf16.mxu0 0
        %2420 = vmatpush1.bf16.msra.mxu0 %v2338
        %2421 = vmatprep.subr.bf16.mxu0 0
        %2422 = vmatpush1.bf16.msra.mxu0 %v2337
        %2423 = vmatprep.subr.bf16.mxu0 0
        %2424 = vmatpush1.bf16.msra.mxu0 %v2336
        %2425 = vmatprep.subr.bf16.mxu0 0
        %2426 = vmatpush1.bf16.msra.mxu0 %v2335
        %2427 = vmatprep.subr.bf16.mxu0 0
        %2428 = vmatpush1.bf16.msra.mxu0 %v2334
        %2429 = vmatprep.subr.bf16.mxu0 0
        %2430 = vmatpush1.bf16.msra.mxu0 %v2333
        %2431 = vmatprep.subr.bf16.mxu0 0
        %2432 = vmatpush1.bf16.msra.mxu0 %v2332
        %2433 = vmatprep.subr.bf16.mxu0 0
        %2434 = vmatpush1.bf16.msra.mxu0 %v2331
        %2435 = vmatprep.subr.bf16.mxu0 0
        %2436 = vmatpush2.bf16.msra.mxu0 %v2346
        %2437 = vmatprep.subr.bf16.mxu0 0
        %2438 = vmatpush2.bf16.msra.mxu0 %v2345
        %2439 = vmatprep.subr.bf16.mxu0 0
        %2440 = vmatpush2.bf16.msra.mxu0 %v2344
        %2441 = vmatprep.subr.bf16.mxu0 0
        %2442 = vmatpush2.bf16.msra.mxu0 %v2343
        %2443 = vmatprep.subr.bf16.mxu0 0
        %2444 = vmatpush2.bf16.msra.mxu0 %v2342
        %2445 = vmatprep.subr.bf16.mxu0 0
        %2446 = vmatpush2.bf16.msra.mxu0 %v2341
        %2447 = vmatprep.subr.bf16.mxu0 0
        %2448 = vmatpush2.bf16.msra.mxu0 %v2340
        %2449 = vmatprep.subr.bf16.mxu0 0
        %2450 = vmatpush2.bf16.msra.mxu0 %v2339
        %2451 = vmatprep.mubr.bf16.mxu0 %v2115
        %2452 = vmatmul.mubr.bf16.gmra.mxu0 %v2114
        %v2453 = vpop.f32.mrf.mxu0
        %v2454 = vadd.f32 %v2414, %v2453
        %v2455 = vpop.f32.mrf.mxu0
        %v2456 = vpop.f32.mrf.mxu0
        %v2457 = vpop.f32.mrf.mxu0
        %2458 = vdwg.mxu0
        %v2459 = vadd.f32 %v1751, %v2454
        %2460 = vst [vmem:[%s696] sm:$0xff] %v2459
        %s2461 = sand.u32 %s370, 1
        %s2462 = scalar_lea.sflag [#allocation7], %s2461
        %s2463 = sand.u32 %s370, 1
        %s2464 = smul.addr %s2463, 8
        %s2465 = scalar_lea.vmem [#allocation16], %s2464
        // Predicated region
        $region97: #{tpu_custom_call.1} parent=67 // pred_check
          %p2466 = pneg %p380
        $region98: #{tpu_custom_call.1} parent=67 // pred_check_branch
          %2468 = sbr.rel (%p2466) target = $region100
        $region99: #{tpu_custom_call.1} parent=67 // pred_region
          %s2470 = ssub.s32 128, 128
          %2471 = vsyncadd %s2462, %s2470
          %s2472 = smul.addr %s42, 128
          %s2473 = scalar_lea.hbm %s12, %s2472
          %s2475 = sshll.u32 %s2465, 4
          %s2476 = int_to_ptr.vmem [resolvable:$true] %s2475
          %2478 = dma.vmem_to_hbm [thread:$0]  %s2476, 128, %s2473, %s2462
        $region100: #{tpu_custom_call.1} parent=67 // pred_fallthru
          _
      $region68: #{tpu_custom_call.1} parent=5 // pred_fallthru
        _
      %p2479 = scmp.le.s32.totalorder 2, %s33
      // Predicated region
      $region101: #{tpu_custom_call.1} parent=5 // pred_check
        %p2480 = pneg %p2479
      $region102: #{tpu_custom_call.1} parent=5 // pred_check_branch
        %2482 = sbr.rel (%p2480) target = $region104
      $region103: #{tpu_custom_call.1} parent=5 // pred_region
        %s2483 = ssub.s32 %s33, 2
        // Predicated region
        $region105: #{tpu_custom_call.1} parent=103 // pred_check
          %p2484 = pneg %p386
        $region106: #{tpu_custom_call.1} parent=103 // pred_check_branch
          %2486 = sbr.rel (%p2484) target = $region108
        $region107: #{tpu_custom_call.1} parent=103 // pred_region
          %s2487 = sand.u32 %s371, 1
          %s2488 = scalar_lea.sflag [#allocation7], %s2487
          %s2489 = sand.u32 %s371, 1
          %s2490 = smul.addr %s2489, 8
          %s2491 = scalar_lea.vmem [#allocation16], %s2490
          %2492 = dma.done %s2488, 128
        $region108: #{tpu_custom_call.1} parent=103 // pred_fallthru
          _
      $region104: #{tpu_custom_call.1} parent=5 // pred_fallthru
        _
    $region6: #{tpu_custom_call.1} parent=1 // loop_footer
      %s37 = sadd.s32 1, %s33
    $region7: #{tpu_custom_call.1} parent=1 // loop_footer_branch
      %32 = sbr.rel target = $region3
    $region8: #{tpu_custom_call.1} parent=1 // loop_exit
      _
    %2493 = vsyncpa [#allocation6], 1
    %s2494 = scalar_lea.sflag [#allocation6], 1
    %2495 = vsyncpa %s2494, 1
    %2496 = vsyncpa [#allocation9], 1
    %s2497 = scalar_lea.sflag [#allocation9], 1
    %2498 = vsyncpa %s2497, 1
    %2499 = vsyncpa [#allocation12], 1
    %s2500 = scalar_lea.sflag [#allocation12], 1
    %2501 = vsyncpa %s2500, 1
    %2502 = vsyncpa [#allocation15], 1
    %s2503 = scalar_lea.sflag [#allocation15], 1
    %2504 = vsyncpa %s2503, 1
    %2505 = vsyncpa [#allocation7], 1
    %s2506 = scalar_lea.sflag [#allocation7], 1
    %2507 = vsyncpa %s2506, 1

</llo_original>
